<compile_context>
chip_gen: v7x
topology: tpu7x:2x2x1
jax: 0.10.0
libtpu: 0.0.40
codegen_flags: <defaults>
</compile_context>

<pallas_src>
import jax
import jax.numpy as jnp
from jax.experimental import pallas as pl
from jax.experimental.pallas import tpu as pltpu


def _integral_kernel(x_ref, o_ref):
    # x_ref: (tile_n, 4 * n_bins) regression logits (natural layout)
    # o_ref: (tile_n, 4)          expected offset per direction
    x = x_ref[...].astype(jnp.float32)
    n_bins = x.shape[-1] // 4

    # projection vector [0, 1, ..., reg_max] built in-kernel (no extra input);
    # hoisted outside the group loop so the broadcast is materialised once.
    proj = jax.lax.broadcasted_iota(jnp.int32, (1, n_bins), 1).astype(jnp.float32)

    cols = []
    for g in range(4):  # static unroll over the 4 box sides
        xg = x[:, g * n_bins:(g + 1) * n_bins]           # (tile_n, n_bins)
        m = jnp.max(xg, axis=-1, keepdims=True)          # stable softmax (per group)
        e = jnp.exp(xg - m)                              # EUP
        den = jnp.sum(e, axis=-1, keepdims=True)         # XLU reduce
        num = jnp.sum(e * proj, axis=-1, keepdims=True)  # sum_i e_i * y_i
        cols.append(num / den)                           # (tile_n, 1)

    o_ref[...] = jnp.concatenate(cols, axis=-1).astype(o_ref.dtype)


def integral(x: jax.Array, reg_max: int = 16, tile_n: int = 8192) -> jax.Array:
    """JAX/Pallas equivalent of Integral.forward.

    Args:
      x: (N, 4*(reg_max+1)) regression-head features.
      reg_max: maximal value of the discrete set.
      tile_n: rows (box predictions) processed per grid step.
    Returns:
      (N, 4) expected distance offsets.
    """
    n_bins = reg_max + 1
    assert x.ndim == 2 and x.shape[1] == 4 * n_bins, x.shape
    n = x.shape[0]

    tile_n = min(tile_n, n)
    if tile_n < n:
        # second-to-last block dim must be a multiple of 8 (or the full dim)
        tile_n = max(8, (tile_n // 8) * 8)
    grid = (pl.cdiv(n, tile_n),)

    itemsize = jnp.dtype(x.dtype).itemsize
    cost = pl.CostEstimate(
        flops=6 * n * 4 * n_bins,            # sub/mul/add per bin (rough)
        transcendentals=n * 4 * n_bins,      # one exp per bin
        bytes_accessed=n * 4 * n_bins * itemsize + n * 4 * itemsize,
    )

    return pl.pallas_call(
        _integral_kernel,
        out_shape=jax.ShapeDtypeStruct((n, 4), x.dtype),
        grid=grid,
        in_specs=[pl.BlockSpec((tile_n, 4 * n_bins), lambda i: (i, 0))],
        out_specs=pl.BlockSpec((tile_n, 4), lambda i: (i, 0)),
        compiler_params=pltpu.CompilerParams(
            dimension_semantics=("parallel",),
            vmem_limit_bytes=32 * 1024 * 1024,
        ),
        cost_estimate=cost,
    )(x)


def _integral_ref(x: jax.Array, reg_max: int = 16) -> jax.Array:
    """Pure-JAX reference for correctness checking."""
    n_bins = reg_max + 1
    xr = x.reshape(-1, n_bins).astype(jnp.float32)
    p = jax.nn.softmax(xr, axis=1)
    proj = jnp.linspace(0.0, float(reg_max), n_bins, dtype=jnp.float32)
    return (p @ proj).reshape(-1, 4).astype(x.dtype)


if __name__ == "__main__":
    reg_max = 16
    N = 200  # number of box predictions
    key = jax.random.PRNGKey(0)
    x = jax.random.normal(key, (N, 4 * (reg_max + 1)), dtype=jnp.float32)

    ref = _integral_ref(x, reg_max=reg_max)

    # single full-array tile (N <= default tile_n)
    out = jax.block_until_ready(integral(x, reg_max=reg_max))
    assert out.shape == (N, 4), out.shape
    assert jnp.allclose(out, ref, atol=1e-4, rtol=1e-4)

    # multi-step grid with a partial last tile (exercises boundary masking
    # and the >=2 parallel steps path used by v7x's two TensorCores)
    out2 = jax.block_until_ready(integral(x, reg_max=reg_max, tile_n=64))
    assert out2.shape == (N, 4), out2.shape
    assert jnp.allclose(out2, ref, atol=1e-4, rtol=1e-4)

    print("KERNEL_OK")
</pallas_src>

<mosaic_0001>
module attributes {stable_mosaic.version = 11 : i64} {
  func.func @_integral_kernel(%arg0: i32, %arg1: memref<200x68xf32, #tpu.memory_space<vmem>>, %arg2: memref<200x4xf32, #tpu.memory_space<vmem>>) attributes {dimension_semantics = [#tpu.dimension_semantics<parallel>], iteration_bounds = array<i64: 1>, scalar_prefetch = 0 : i64, scratch_operands = 0 : i64, tpu.core_type = #tpu.core_type<tc>, window_params = [{transform_indices = @transform_0, window_bounds = array<i64: 200, 68>}, {transform_indices = @transform_1, window_bounds = array<i64: 200, 4>}]} {
    %c0 = arith.constant 0 : index
    %c0_0 = arith.constant 0 : index
    %0 = vector.load %arg1[%c0, %c0_0] : memref<200x68xf32, #tpu.memory_space<vmem>>, vector<200x68xf32>
    %1 = tpu.iota {dimensions = array<i32: 1>} : vector<1x17xi32>
    %2 = arith.sitofp %1 : vector<1x17xi32> to vector<1x17xf32>
    %3 = vector.extract_strided_slice %0 {offsets = [0, 0], sizes = [200, 17], strides = [1, 1]} : vector<200x68xf32> to vector<200x17xf32>
    %cst = arith.constant dense<0xFF800000> : vector<200xf32>
    %4 = vector.multi_reduction <maximumf>, %3, %cst [1] : vector<200x17xf32> to vector<200xf32>
    %5 = vector.shape_cast %4 : vector<200xf32> to vector<200x1xf32>
    %6 = vector.broadcast %5 : vector<200x1xf32> to vector<200x17xf32>
    %7 = arith.subf %3, %6 : vector<200x17xf32>
    %8 = math.exp %7 : vector<200x17xf32>
    %cst_1 = arith.constant dense<0.000000e+00> : vector<200xf32>
    %9 = vector.multi_reduction <add>, %8, %cst_1 [1] : vector<200x17xf32> to vector<200xf32>
    %10 = vector.shape_cast %9 : vector<200xf32> to vector<200x1xf32>
    %11 = vector.broadcast %2 : vector<1x17xf32> to vector<200x17xf32>
    %12 = arith.mulf %8, %11 : vector<200x17xf32>
    %cst_2 = arith.constant dense<0.000000e+00> : vector<200xf32>
    %13 = vector.multi_reduction <add>, %12, %cst_2 [1] : vector<200x17xf32> to vector<200xf32>
    %14 = vector.shape_cast %13 : vector<200xf32> to vector<200x1xf32>
    %15 = arith.divf %14, %10 : vector<200x1xf32>
    %16 = vector.extract_strided_slice %0 {offsets = [0, 17], sizes = [200, 17], strides = [1, 1]} : vector<200x68xf32> to vector<200x17xf32>
    %cst_3 = arith.constant dense<0xFF800000> : vector<200xf32>
    %17 = vector.multi_reduction <maximumf>, %16, %cst_3 [1] : vector<200x17xf32> to vector<200xf32>
    %18 = vector.shape_cast %17 : vector<200xf32> to vector<200x1xf32>
    %19 = vector.broadcast %18 : vector<200x1xf32> to vector<200x17xf32>
    %20 = arith.subf %16, %19 : vector<200x17xf32>
    %21 = math.exp %20 : vector<200x17xf32>
    %cst_4 = arith.constant dense<0.000000e+00> : vector<200xf32>
    %22 = vector.multi_reduction <add>, %21, %cst_4 [1] : vector<200x17xf32> to vector<200xf32>
    %23 = vector.shape_cast %22 : vector<200xf32> to vector<200x1xf32>
    %24 = vector.broadcast %2 : vector<1x17xf32> to vector<200x17xf32>
    %25 = arith.mulf %21, %24 : vector<200x17xf32>
    %cst_5 = arith.constant dense<0.000000e+00> : vector<200xf32>
    %26 = vector.multi_reduction <add>, %25, %cst_5 [1] : vector<200x17xf32> to vector<200xf32>
    %27 = vector.shape_cast %26 : vector<200xf32> to vector<200x1xf32>
    %28 = arith.divf %27, %23 : vector<200x1xf32>
    %29 = vector.extract_strided_slice %0 {offsets = [0, 34], sizes = [200, 17], strides = [1, 1]} : vector<200x68xf32> to vector<200x17xf32>
    %cst_6 = arith.constant dense<0xFF800000> : vector<200xf32>
    %30 = vector.multi_reduction <maximumf>, %29, %cst_6 [1] : vector<200x17xf32> to vector<200xf32>
    %31 = vector.shape_cast %30 : vector<200xf32> to vector<200x1xf32>
    %32 = vector.broadcast %31 : vector<200x1xf32> to vector<200x17xf32>
    %33 = arith.subf %29, %32 : vector<200x17xf32>
    %34 = math.exp %33 : vector<200x17xf32>
    %cst_7 = arith.constant dense<0.000000e+00> : vector<200xf32>
    %35 = vector.multi_reduction <add>, %34, %cst_7 [1] : vector<200x17xf32> to vector<200xf32>
    %36 = vector.shape_cast %35 : vector<200xf32> to vector<200x1xf32>
    %37 = vector.broadcast %2 : vector<1x17xf32> to vector<200x17xf32>
    %38 = arith.mulf %34, %37 : vector<200x17xf32>
    %cst_8 = arith.constant dense<0.000000e+00> : vector<200xf32>
    %39 = vector.multi_reduction <add>, %38, %cst_8 [1] : vector<200x17xf32> to vector<200xf32>
    %40 = vector.shape_cast %39 : vector<200xf32> to vector<200x1xf32>
    %41 = arith.divf %40, %36 : vector<200x1xf32>
    %42 = vector.extract_strided_slice %0 {offsets = [0, 51], sizes = [200, 17], strides = [1, 1]} : vector<200x68xf32> to vector<200x17xf32>
    %cst_9 = arith.constant dense<0xFF800000> : vector<200xf32>
    %43 = vector.multi_reduction <maximumf>, %42, %cst_9 [1] : vector<200x17xf32> to vector<200xf32>
    %44 = vector.shape_cast %43 : vector<200xf32> to vector<200x1xf32>
    %45 = vector.broadcast %44 : vector<200x1xf32> to vector<200x17xf32>
    %46 = arith.subf %42, %45 : vector<200x17xf32>
    %47 = math.exp %46 : vector<200x17xf32>
    %cst_10 = arith.constant dense<0.000000e+00> : vector<200xf32>
    %48 = vector.multi_reduction <add>, %47, %cst_10 [1] : vector<200x17xf32> to vector<200xf32>
    %49 = vector.shape_cast %48 : vector<200xf32> to vector<200x1xf32>
    %50 = vector.broadcast %2 : vector<1x17xf32> to vector<200x17xf32>
    %51 = arith.mulf %47, %50 : vector<200x17xf32>
    %cst_11 = arith.constant dense<0.000000e+00> : vector<200xf32>
    %52 = vector.multi_reduction <add>, %51, %cst_11 [1] : vector<200x17xf32> to vector<200xf32>
    %53 = vector.shape_cast %52 : vector<200xf32> to vector<200x1xf32>
    %54 = arith.divf %53, %49 : vector<200x1xf32>
    %55 = tpu.concatenate %15, %28, %41, %54 in 1 : vector<200x1xf32>, vector<200x1xf32>, vector<200x1xf32>, vector<200x1xf32> -> vector<200x4xf32>
    %c0_12 = arith.constant 0 : index
    %c0_13 = arith.constant 0 : index
    %56 = vector.load %arg2[%c0_12, %c0_13] : memref<200x4xf32, #tpu.memory_space<vmem>>, vector<200x4xf32>
    tpu.vector_store %arg2[%c0_12, %c0_13], %55 {strides = array<i32>} : memref<200x4xf32, #tpu.memory_space<vmem>>, vector<200x4xf32>,
    return
  }
  func.func @transform_0(%arg0: i32) -> (i32, i32) {
    %c0_i32 = arith.constant 0 : i32
    %c0_i32_0 = arith.constant 0 : i32
    return %arg0, %c0_i32 : i32, i32
  }
  func.func @transform_1(%arg0: i32) -> (i32, i32) {
    %c0_i32 = arith.constant 0 : i32
    %c0_i32_0 = arith.constant 0 : i32
    return %arg0, %c0_i32 : i32, i32
  }
}

</mosaic_0001>

<llo_original>
// kernel: tpu_custom_call.1
$region0: #{tpu_custom_call.1}
  #allocation0 [shape = 'u32[]', space=smem, size = 0x4, offset = 0x4, fixed_abs, tag = 'smem constant byte address 0x4 - core index']
  #allocation1 [shape = 'u32[144,128]{1,0:T(1,128)}', space=vmem, size = 0x12000, scoped, tag = 'internal scratch']
  %s0 = inlined_call_operand.vmem [shape: f32[200,68], index: 0, kind: input, shape index: {}]
  %s1 = inlined_call_operand.vmem [shape: f32[200,4], index: 1, kind: output, shape index: {}]
  %s2 = sld [smem:[#allocation0]]
  $region14: #{tpu_custom_call.1} parent=0
    _
  %s4 = ssub.s32 1, %s2
  %s5 = scalar_select 0, %s4, %s2
  // Predicated region
  $region2: #{tpu_custom_call.1} parent=0 // pred_check
    _
  $region3: #{tpu_custom_call.1} parent=0 // pred_check_branch
    %7 = sbr.rel (0) target = $region5
  $region4: #{tpu_custom_call.1} parent=0 // pred_region
    _
  $region5: #{tpu_custom_call.1} parent=0 // pred_fallthru
    _
  %v8 = vld [vmem:[%s0] sm:$0xff]
  %v9 = vld [vmem:[%s0 + $0x8] sm:$0xff]
  %v10 = vld [vmem:[%s0 + $0x10] sm:$0xff]
  %v11 = vld [vmem:[%s0 + $0x18] sm:$0xff]
  %v12 = vld [vmem:[%s0 + $0x20] sm:$0xff]
  %v13 = vld [vmem:[%s0 + $0x28] sm:$0xff]
  %v14 = vld [vmem:[%s0 + $0x30] sm:$0xff]
  %v15 = vld [vmem:[%s0 + $0x38] sm:$0xff]
  %v16 = vld [vmem:[%s0 + $0x40] sm:$0xff]
  %v17 = vld [vmem:[%s0 + $0x48] sm:$0xff]
  %v18 = vld [vmem:[%s0 + $0x50] sm:$0xff]
  %v19 = vld [vmem:[%s0 + $0x58] sm:$0xff]
  %v20 = vld [vmem:[%s0 + $0x60] sm:$0xff]
  %v21 = vld [vmem:[%s0 + $0x68] sm:$0xff]
  %v22 = vld [vmem:[%s0 + $0x70] sm:$0xff]
  %v23 = vld [vmem:[%s0 + $0x78] sm:$0xff]
  %v24 = vld [vmem:[%s0 + $0x80] sm:$0xff]
  %v25 = vld [vmem:[%s0 + $0x88] sm:$0xff]
  %v26 = vld [vmem:[%s0 + $0x90] sm:$0xff]
  %v27 = vld [vmem:[%s0 + $0x98] sm:$0xff]
  %v28 = vld [vmem:[%s0 + $0xa0] sm:$0xff]
  %v29 = vld [vmem:[%s0 + $0xa8] sm:$0xff]
  %v30 = vld [vmem:[%s0 + $0xb0] sm:$0xff]
  %v31 = vld [vmem:[%s0 + $0xb8] sm:$0xff]
  %v32 = vld [vmem:[%s0 + $0xc0] sm:$0xff]
  %v33 = vlaneseq
  %v34 = vand.u32 %v33, 127
  %v35 = vcvt.s32.f32 %v34
  %vm36 = vcmask 138240
  %v37 = vsel %vm36, %v8, -inf
  %38 = vmax.xlane.f32.xlu0 %v37
  %v39 = vpop.xlane.xlu0 %38
  %v40 = vsel %vm36, %v9, -inf
  %41 = vmax.xlane.f32.xlu0 %v40
  %v42 = vpop.xlane.xlu0 %41
  %v43 = vsel %vm36, %v10, -inf
  %44 = vmax.xlane.f32.xlu0 %v43
  %v45 = vpop.xlane.xlu0 %44
  %v46 = vsel %vm36, %v11, -inf
  %47 = vmax.xlane.f32.xlu0 %v46
  %v48 = vpop.xlane.xlu0 %47
  %v49 = vsel %vm36, %v12, -inf
  %50 = vmax.xlane.f32.xlu0 %v49
  %v51 = vpop.xlane.xlu0 %50
  %v52 = vsel %vm36, %v13, -inf
  %53 = vmax.xlane.f32.xlu0 %v52
  %v54 = vpop.xlane.xlu0 %53
  %v55 = vsel %vm36, %v14, -inf
  %56 = vmax.xlane.f32.xlu0 %v55
  %v57 = vpop.xlane.xlu0 %56
  %v58 = vsel %vm36, %v15, -inf
  %59 = vmax.xlane.f32.xlu0 %v58
  %v60 = vpop.xlane.xlu0 %59
  %v61 = vsel %vm36, %v16, -inf
  %62 = vmax.xlane.f32.xlu0 %v61
  %v63 = vpop.xlane.xlu0 %62
  %v64 = vsel %vm36, %v17, -inf
  %65 = vmax.xlane.f32.xlu0 %v64
  %v66 = vpop.xlane.xlu0 %65
  %v67 = vsel %vm36, %v18, -inf
  %68 = vmax.xlane.f32.xlu0 %v67
  %v69 = vpop.xlane.xlu0 %68
  %v70 = vsel %vm36, %v19, -inf
  %71 = vmax.xlane.f32.xlu0 %v70
  %v72 = vpop.xlane.xlu0 %71
  %v73 = vsel %vm36, %v20, -inf
  %74 = vmax.xlane.f32.xlu0 %v73
  %v75 = vpop.xlane.xlu0 %74
  %v76 = vsel %vm36, %v21, -inf
  %77 = vmax.xlane.f32.xlu0 %v76
  %v78 = vpop.xlane.xlu0 %77
  %v79 = vsel %vm36, %v22, -inf
  %80 = vmax.xlane.f32.xlu0 %v79
  %v81 = vpop.xlane.xlu0 %80
  %v82 = vsel %vm36, %v23, -inf
  %83 = vmax.xlane.f32.xlu0 %v82
  %v84 = vpop.xlane.xlu0 %83
  %v85 = vsel %vm36, %v24, -inf
  %86 = vmax.xlane.f32.xlu0 %v85
  %v87 = vpop.xlane.xlu0 %86
  %v88 = vsel %vm36, %v25, -inf
  %89 = vmax.xlane.f32.xlu0 %v88
  %v90 = vpop.xlane.xlu0 %89
  %v91 = vsel %vm36, %v26, -inf
  %92 = vmax.xlane.f32.xlu0 %v91
  %v93 = vpop.xlane.xlu0 %92
  %v94 = vsel %vm36, %v27, -inf
  %95 = vmax.xlane.f32.xlu0 %v94
  %v96 = vpop.xlane.xlu0 %95
  %v97 = vsel %vm36, %v28, -inf
  %98 = vmax.xlane.f32.xlu0 %v97
  %v99 = vpop.xlane.xlu0 %98
  %v100 = vsel %vm36, %v29, -inf
  %101 = vmax.xlane.f32.xlu0 %v100
  %v102 = vpop.xlane.xlu0 %101
  %v103 = vsel %vm36, %v30, -inf
  %104 = vmax.xlane.f32.xlu0 %v103
  %v105 = vpop.xlane.xlu0 %104
  %v106 = vsel %vm36, %v31, -inf
  %107 = vmax.xlane.f32.xlu0 %v106
  %v108 = vpop.xlane.xlu0 %107
  %v109 = vsel %vm36, %v32, -inf
  %110 = vmax.xlane.f32.xlu0 %v109
  %v111 = vpop.xlane.xlu0 %110
  %v112 = vsub.f32 %v8, %v39
  %v113 = vsub.f32 %v9, %v42
  %v114 = vsub.f32 %v10, %v45
  %v115 = vsub.f32 %v11, %v48
  %v116 = vsub.f32 %v12, %v51
  %v117 = vsub.f32 %v13, %v54
  %v118 = vsub.f32 %v14, %v57
  %v119 = vsub.f32 %v15, %v60
  %v120 = vsub.f32 %v16, %v63
  %v121 = vsub.f32 %v17, %v66
  %v122 = vsub.f32 %v18, %v69
  %v123 = vsub.f32 %v19, %v72
  %v124 = vsub.f32 %v20, %v75
  %v125 = vsub.f32 %v21, %v78
  %v126 = vsub.f32 %v22, %v81
  %v127 = vsub.f32 %v23, %v84
  %v128 = vsub.f32 %v24, %v87
  %v129 = vsub.f32 %v25, %v90
  %v130 = vsub.f32 %v26, %v93
  %v131 = vsub.f32 %v27, %v96
  %v132 = vsub.f32 %v28, %v99
  %v133 = vsub.f32 %v29, %v102
  %v134 = vsub.f32 %v30, %v105
  %v135 = vsub.f32 %v31, %v108
  %v136 = vsub.f32 %v32, %v111
  %v137 = vmul.f32 %v112, 1.442695
  %v138 = vpow.pop %v137
  %v139 = vmul.f32 %v113, 1.442695
  %v140 = vpow.pop %v139
  %v141 = vmul.f32 %v114, 1.442695
  %v142 = vpow.pop %v141
  %v143 = vmul.f32 %v115, 1.442695
  %v144 = vpow.pop %v143
  %v145 = vmul.f32 %v116, 1.442695
  %v146 = vpow.pop %v145
  %v147 = vmul.f32 %v117, 1.442695
  %v148 = vpow.pop %v147
  %v149 = vmul.f32 %v118, 1.442695
  %v150 = vpow.pop %v149
  %v151 = vmul.f32 %v119, 1.442695
  %v152 = vpow.pop %v151
  %v153 = vmul.f32 %v120, 1.442695
  %v154 = vpow.pop %v153
  %v155 = vmul.f32 %v121, 1.442695
  %v156 = vpow.pop %v155
  %v157 = vmul.f32 %v122, 1.442695
  %v158 = vpow.pop %v157
  %v159 = vmul.f32 %v123, 1.442695
  %v160 = vpow.pop %v159
  %v161 = vmul.f32 %v124, 1.442695
  %v162 = vpow.pop %v161
  %v163 = vmul.f32 %v125, 1.442695
  %v164 = vpow.pop %v163
  %v165 = vmul.f32 %v126, 1.442695
  %v166 = vpow.pop %v165
  %v167 = vmul.f32 %v127, 1.442695
  %v168 = vpow.pop %v167
  %v169 = vmul.f32 %v128, 1.442695
  %v170 = vpow.pop %v169
  %v171 = vmul.f32 %v129, 1.442695
  %v172 = vpow.pop %v171
  %v173 = vmul.f32 %v130, 1.442695
  %v174 = vpow.pop %v173
  %v175 = vmul.f32 %v131, 1.442695
  %v176 = vpow.pop %v175
  %v177 = vmul.f32 %v132, 1.442695
  %v178 = vpow.pop %v177
  %v179 = vmul.f32 %v133, 1.442695
  %v180 = vpow.pop %v179
  %v181 = vmul.f32 %v134, 1.442695
  %v182 = vpow.pop %v181
  %v183 = vmul.f32 %v135, 1.442695
  %v184 = vpow.pop %v183
  %v185 = vmul.f32 %v136, 1.442695
  %v186 = vpow.pop %v185
  %v187 = vsel %vm36, %v138, 0.0
  %188 = vadd.xlane.f32.xlu0 %v187
  %v189 = vpop.xlane.xlu0 %188
  %v190 = vsel %vm36, %v140, 0.0
  %191 = vadd.xlane.f32.xlu0 %v190
  %v192 = vpop.xlane.xlu0 %191
  %v193 = vsel %vm36, %v142, 0.0
  %194 = vadd.xlane.f32.xlu0 %v193
  %v195 = vpop.xlane.xlu0 %194
  %v196 = vsel %vm36, %v144, 0.0
  %197 = vadd.xlane.f32.xlu0 %v196
  %v198 = vpop.xlane.xlu0 %197
  %v199 = vsel %vm36, %v146, 0.0
  %200 = vadd.xlane.f32.xlu0 %v199
  %v201 = vpop.xlane.xlu0 %200
  %v202 = vsel %vm36, %v148, 0.0
  %203 = vadd.xlane.f32.xlu0 %v202
  %v204 = vpop.xlane.xlu0 %203
  %v205 = vsel %vm36, %v150, 0.0
  %206 = vadd.xlane.f32.xlu0 %v205
  %v207 = vpop.xlane.xlu0 %206
  %v208 = vsel %vm36, %v152, 0.0
  %209 = vadd.xlane.f32.xlu0 %v208
  %v210 = vpop.xlane.xlu0 %209
  %v211 = vsel %vm36, %v154, 0.0
  %212 = vadd.xlane.f32.xlu0 %v211
  %v213 = vpop.xlane.xlu0 %212
  %v214 = vsel %vm36, %v156, 0.0
  %215 = vadd.xlane.f32.xlu0 %v214
  %v216 = vpop.xlane.xlu0 %215
  %v217 = vsel %vm36, %v158, 0.0
  %218 = vadd.xlane.f32.xlu0 %v217
  %v219 = vpop.xlane.xlu0 %218
  %v220 = vsel %vm36, %v160, 0.0
  %221 = vadd.xlane.f32.xlu0 %v220
  %v222 = vpop.xlane.xlu0 %221
  %v223 = vsel %vm36, %v162, 0.0
  %224 = vadd.xlane.f32.xlu0 %v223
  %v225 = vpop.xlane.xlu0 %224
  %v226 = vsel %vm36, %v164, 0.0
  %227 = vadd.xlane.f32.xlu0 %v226
  %v228 = vpop.xlane.xlu0 %227
  %v229 = vsel %vm36, %v166, 0.0
  %230 = vadd.xlane.f32.xlu0 %v229
  %v231 = vpop.xlane.xlu0 %230
  %v232 = vsel %vm36, %v168, 0.0
  %233 = vadd.xlane.f32.xlu0 %v232
  %v234 = vpop.xlane.xlu0 %233
  %v235 = vsel %vm36, %v170, 0.0
  %236 = vadd.xlane.f32.xlu0 %v235
  %v237 = vpop.xlane.xlu0 %236
  %v238 = vsel %vm36, %v172, 0.0
  %239 = vadd.xlane.f32.xlu0 %v238
  %v240 = vpop.xlane.xlu0 %239
  %v241 = vsel %vm36, %v174, 0.0
  %242 = vadd.xlane.f32.xlu0 %v241
  %v243 = vpop.xlane.xlu0 %242
  %v244 = vsel %vm36, %v176, 0.0
  %245 = vadd.xlane.f32.xlu0 %v244
  %v246 = vpop.xlane.xlu0 %245
  %v247 = vsel %vm36, %v178, 0.0
  %248 = vadd.xlane.f32.xlu0 %v247
  %v249 = vpop.xlane.xlu0 %248
  %v250 = vsel %vm36, %v180, 0.0
  %251 = vadd.xlane.f32.xlu0 %v250
  %v252 = vpop.xlane.xlu0 %251
  %v253 = vsel %vm36, %v182, 0.0
  %254 = vadd.xlane.f32.xlu0 %v253
  %v255 = vpop.xlane.xlu0 %254
  %v256 = vsel %vm36, %v184, 0.0
  %257 = vadd.xlane.f32.xlu0 %v256
  %v258 = vpop.xlane.xlu0 %257
  %v259 = vsel %vm36, %v186, 0.0
  %260 = vadd.xlane.f32.xlu0 %v259
  %v261 = vpop.xlane.xlu0 %260
  %v262 = vmul.f32 %v138, %v35
  %v263 = vmul.f32 %v140, %v35
  %v264 = vmul.f32 %v142, %v35
  %v265 = vmul.f32 %v144, %v35
  %v266 = vmul.f32 %v146, %v35
  %v267 = vmul.f32 %v148, %v35
  %v268 = vmul.f32 %v150, %v35
  %v269 = vmul.f32 %v152, %v35
  %v270 = vmul.f32 %v154, %v35
  %v271 = vmul.f32 %v156, %v35
  %v272 = vmul.f32 %v158, %v35
  %v273 = vmul.f32 %v160, %v35
  %v274 = vmul.f32 %v162, %v35
  %v275 = vmul.f32 %v164, %v35
  %v276 = vmul.f32 %v166, %v35
  %v277 = vmul.f32 %v168, %v35
  %v278 = vmul.f32 %v170, %v35
  %v279 = vmul.f32 %v172, %v35
  %v280 = vmul.f32 %v174, %v35
  %v281 = vmul.f32 %v176, %v35
  %v282 = vmul.f32 %v178, %v35
  %v283 = vmul.f32 %v180, %v35
  %v284 = vmul.f32 %v182, %v35
  %v285 = vmul.f32 %v184, %v35
  %v286 = vmul.f32 %v186, %v35
  %v287 = vsel %vm36, %v262, 0.0
  %288 = vadd.xlane.f32.xlu0 %v287
  %v289 = vpop.xlane.xlu0 %288
  %v290 = vsel %vm36, %v263, 0.0
  %291 = vadd.xlane.f32.xlu0 %v290
  %v292 = vpop.xlane.xlu0 %291
  %v293 = vsel %vm36, %v264, 0.0
  %294 = vadd.xlane.f32.xlu0 %v293
  %v295 = vpop.xlane.xlu0 %294
  %v296 = vsel %vm36, %v265, 0.0
  %297 = vadd.xlane.f32.xlu0 %v296
  %v298 = vpop.xlane.xlu0 %297
  %v299 = vsel %vm36, %v266, 0.0
  %300 = vadd.xlane.f32.xlu0 %v299
  %v301 = vpop.xlane.xlu0 %300
  %v302 = vsel %vm36, %v267, 0.0
  %303 = vadd.xlane.f32.xlu0 %v302
  %v304 = vpop.xlane.xlu0 %303
  %v305 = vsel %vm36, %v268, 0.0
  %306 = vadd.xlane.f32.xlu0 %v305
  %v307 = vpop.xlane.xlu0 %306
  %v308 = vsel %vm36, %v269, 0.0
  %309 = vadd.xlane.f32.xlu0 %v308
  %v310 = vpop.xlane.xlu0 %309
  %v311 = vsel %vm36, %v270, 0.0
  %312 = vadd.xlane.f32.xlu0 %v311
  %v313 = vpop.xlane.xlu0 %312
  %v314 = vsel %vm36, %v271, 0.0
  %315 = vadd.xlane.f32.xlu0 %v314
  %v316 = vpop.xlane.xlu0 %315
  %v317 = vsel %vm36, %v272, 0.0
  %318 = vadd.xlane.f32.xlu0 %v317
  %v319 = vpop.xlane.xlu0 %318
  %v320 = vsel %vm36, %v273, 0.0
  %321 = vadd.xlane.f32.xlu0 %v320
  %v322 = vpop.xlane.xlu0 %321
  %v323 = vsel %vm36, %v274, 0.0
  %324 = vadd.xlane.f32.xlu0 %v323
  %v325 = vpop.xlane.xlu0 %324
  %v326 = vsel %vm36, %v275, 0.0
  %327 = vadd.xlane.f32.xlu0 %v326
  %v328 = vpop.xlane.xlu0 %327
  %v329 = vsel %vm36, %v276, 0.0
  %330 = vadd.xlane.f32.xlu0 %v329
  %v331 = vpop.xlane.xlu0 %330
  %v332 = vsel %vm36, %v277, 0.0
  %333 = vadd.xlane.f32.xlu0 %v332
  %v334 = vpop.xlane.xlu0 %333
  %v335 = vsel %vm36, %v278, 0.0
  %336 = vadd.xlane.f32.xlu0 %v335
  %v337 = vpop.xlane.xlu0 %336
  %v338 = vsel %vm36, %v279, 0.0
  %339 = vadd.xlane.f32.xlu0 %v338
  %v340 = vpop.xlane.xlu0 %339
  %v341 = vsel %vm36, %v280, 0.0
  %342 = vadd.xlane.f32.xlu0 %v341
  %v343 = vpop.xlane.xlu0 %342
  %v344 = vsel %vm36, %v281, 0.0
  %345 = vadd.xlane.f32.xlu0 %v344
  %v346 = vpop.xlane.xlu0 %345
  %v347 = vsel %vm36, %v282, 0.0
  %348 = vadd.xlane.f32.xlu0 %v347
  %v349 = vpop.xlane.xlu0 %348
  %v350 = vsel %vm36, %v283, 0.0
  %351 = vadd.xlane.f32.xlu0 %v350
  %v352 = vpop.xlane.xlu0 %351
  %v353 = vsel %vm36, %v284, 0.0
  %354 = vadd.xlane.f32.xlu0 %v353
  %v355 = vpop.xlane.xlu0 %354
  %v356 = vsel %vm36, %v285, 0.0
  %357 = vadd.xlane.f32.xlu0 %v356
  %v358 = vpop.xlane.xlu0 %357
  %v359 = vsel %vm36, %v286, 0.0
  %360 = vadd.xlane.f32.xlu0 %v359
  %v361 = vpop.xlane.xlu0 %360
  %v362 = vrcp.pop %v189
  %v363 = vmul.f32 %v289, %v362
  %v364 = vrcp.pop %v192
  %v365 = vmul.f32 %v292, %v364
  %v366 = vrcp.pop %v195
  %v367 = vmul.f32 %v295, %v366
  %v368 = vrcp.pop %v198
  %v369 = vmul.f32 %v298, %v368
  %v370 = vrcp.pop %v201
  %v371 = vmul.f32 %v301, %v370
  %v372 = vrcp.pop %v204
  %v373 = vmul.f32 %v304, %v372
  %v374 = vrcp.pop %v207
  %v375 = vmul.f32 %v307, %v374
  %v376 = vrcp.pop %v210
  %v377 = vmul.f32 %v310, %v376
  %v378 = vrcp.pop %v213
  %v379 = vmul.f32 %v313, %v378
  %v380 = vrcp.pop %v216
  %v381 = vmul.f32 %v316, %v380
  %v382 = vrcp.pop %v219
  %v383 = vmul.f32 %v319, %v382
  %v384 = vrcp.pop %v222
  %v385 = vmul.f32 %v322, %v384
  %v386 = vrcp.pop %v225
  %v387 = vmul.f32 %v325, %v386
  %v388 = vrcp.pop %v228
  %v389 = vmul.f32 %v328, %v388
  %v390 = vrcp.pop %v231
  %v391 = vmul.f32 %v331, %v390
  %v392 = vrcp.pop %v234
  %v393 = vmul.f32 %v334, %v392
  %v394 = vrcp.pop %v237
  %v395 = vmul.f32 %v337, %v394
  %v396 = vrcp.pop %v240
  %v397 = vmul.f32 %v340, %v396
  %v398 = vrcp.pop %v243
  %v399 = vmul.f32 %v343, %v398
  %v400 = vrcp.pop %v246
  %v401 = vmul.f32 %v346, %v400
  %v402 = vrcp.pop %v249
  %v403 = vmul.f32 %v349, %v402
  %v404 = vrcp.pop %v252
  %v405 = vmul.f32 %v352, %v404
  %v406 = vrcp.pop %v255
  %v407 = vmul.f32 %v355, %v406
  %v408 = vrcp.pop %v258
  %v409 = vmul.f32 %v358, %v408
  %v410 = vrcp.pop %v261
  %v411 = vmul.f32 %v361, %v410
  %vm412 = vcmask 277640
  %v413 = vsel %vm412, %v8, -inf
  %414 = vmax.xlane.f32.xlu0 %v413
  %v415 = vpop.xlane.xlu0 %414
  %v416 = vsel %vm412, %v9, -inf
  %417 = vmax.xlane.f32.xlu0 %v416
  %v418 = vpop.xlane.xlu0 %417
  %v419 = vsel %vm412, %v10, -inf
  %420 = vmax.xlane.f32.xlu0 %v419
  %v421 = vpop.xlane.xlu0 %420
  %v422 = vsel %vm412, %v11, -inf
  %423 = vmax.xlane.f32.xlu0 %v422
  %v424 = vpop.xlane.xlu0 %423
  %v425 = vsel %vm412, %v12, -inf
  %426 = vmax.xlane.f32.xlu0 %v425
  %v427 = vpop.xlane.xlu0 %426
  %v428 = vsel %vm412, %v13, -inf
  %429 = vmax.xlane.f32.xlu0 %v428
  %v430 = vpop.xlane.xlu0 %429
  %v431 = vsel %vm412, %v14, -inf
  %432 = vmax.xlane.f32.xlu0 %v431
  %v433 = vpop.xlane.xlu0 %432
  %v434 = vsel %vm412, %v15, -inf
  %435 = vmax.xlane.f32.xlu0 %v434
  %v436 = vpop.xlane.xlu0 %435
  %v437 = vsel %vm412, %v16, -inf
  %438 = vmax.xlane.f32.xlu0 %v437
  %v439 = vpop.xlane.xlu0 %438
  %v440 = vsel %vm412, %v17, -inf
  %441 = vmax.xlane.f32.xlu0 %v440
  %v442 = vpop.xlane.xlu0 %441
  %v443 = vsel %vm412, %v18, -inf
  %444 = vmax.xlane.f32.xlu0 %v443
  %v445 = vpop.xlane.xlu0 %444
  %v446 = vsel %vm412, %v19, -inf
  %447 = vmax.xlane.f32.xlu0 %v446
  %v448 = vpop.xlane.xlu0 %447
  %v449 = vsel %vm412, %v20, -inf
  %450 = vmax.xlane.f32.xlu0 %v449
  %v451 = vpop.xlane.xlu0 %450
  %v452 = vsel %vm412, %v21, -inf
  %453 = vmax.xlane.f32.xlu0 %v452
  %v454 = vpop.xlane.xlu0 %453
  %v455 = vsel %vm412, %v22, -inf
  %456 = vmax.xlane.f32.xlu0 %v455
  %v457 = vpop.xlane.xlu0 %456
  %v458 = vsel %vm412, %v23, -inf
  %459 = vmax.xlane.f32.xlu0 %v458
  %v460 = vpop.xlane.xlu0 %459
  %v461 = vsel %vm412, %v24, -inf
  %462 = vmax.xlane.f32.xlu0 %v461
  %v463 = vpop.xlane.xlu0 %462
  %v464 = vsel %vm412, %v25, -inf
  %465 = vmax.xlane.f32.xlu0 %v464
  %v466 = vpop.xlane.xlu0 %465
  %v467 = vsel %vm412, %v26, -inf
  %468 = vmax.xlane.f32.xlu0 %v467
  %v469 = vpop.xlane.xlu0 %468
  %v470 = vsel %vm412, %v27, -inf
  %471 = vmax.xlane.f32.xlu0 %v470
  %v472 = vpop.xlane.xlu0 %471
  %v473 = vsel %vm412, %v28, -inf
  %474 = vmax.xlane.f32.xlu0 %v473
  %v475 = vpop.xlane.xlu0 %474
  %v476 = vsel %vm412, %v29, -inf
  %477 = vmax.xlane.f32.xlu0 %v476
  %v478 = vpop.xlane.xlu0 %477
  %v479 = vsel %vm412, %v30, -inf
  %480 = vmax.xlane.f32.xlu0 %v479
  %v481 = vpop.xlane.xlu0 %480
  %v482 = vsel %vm412, %v31, -inf
  %483 = vmax.xlane.f32.xlu0 %v482
  %v484 = vpop.xlane.xlu0 %483
  %v485 = vsel %vm412, %v32, -inf
  %486 = vmax.xlane.f32.xlu0 %v485
  %v487 = vpop.xlane.xlu0 %486
  %v488 = vsub.f32 %v8, %v415
  %v489 = vsub.f32 %v9, %v418
  %v490 = vsub.f32 %v10, %v421
  %v491 = vsub.f32 %v11, %v424
  %v492 = vsub.f32 %v12, %v427
  %v493 = vsub.f32 %v13, %v430
  %v494 = vsub.f32 %v14, %v433
  %v495 = vsub.f32 %v15, %v436
  %v496 = vsub.f32 %v16, %v439
  %v497 = vsub.f32 %v17, %v442
  %v498 = vsub.f32 %v18, %v445
  %v499 = vsub.f32 %v19, %v448
  %v500 = vsub.f32 %v20, %v451
  %v501 = vsub.f32 %v21, %v454
  %v502 = vsub.f32 %v22, %v457
  %v503 = vsub.f32 %v23, %v460
  %v504 = vsub.f32 %v24, %v463
  %v505 = vsub.f32 %v25, %v466
  %v506 = vsub.f32 %v26, %v469
  %v507 = vsub.f32 %v27, %v472
  %v508 = vsub.f32 %v28, %v475
  %v509 = vsub.f32 %v29, %v478
  %v510 = vsub.f32 %v30, %v481
  %v511 = vsub.f32 %v31, %v484
  %v512 = vsub.f32 %v32, %v487
  %v513 = vmul.f32 %v488, 1.442695
  %v514 = vpow.pop %v513
  %v515 = vmul.f32 %v489, 1.442695
  %v516 = vpow.pop %v515
  %v517 = vmul.f32 %v490, 1.442695
  %v518 = vpow.pop %v517
  %v519 = vmul.f32 %v491, 1.442695
  %v520 = vpow.pop %v519
  %v521 = vmul.f32 %v492, 1.442695
  %v522 = vpow.pop %v521
  %v523 = vmul.f32 %v493, 1.442695
  %v524 = vpow.pop %v523
  %v525 = vmul.f32 %v494, 1.442695
  %v526 = vpow.pop %v525
  %v527 = vmul.f32 %v495, 1.442695
  %v528 = vpow.pop %v527
  %v529 = vmul.f32 %v496, 1.442695
  %v530 = vpow.pop %v529
  %v531 = vmul.f32 %v497, 1.442695
  %v532 = vpow.pop %v531
  %v533 = vmul.f32 %v498, 1.442695
  %v534 = vpow.pop %v533
  %v535 = vmul.f32 %v499, 1.442695
  %v536 = vpow.pop %v535
  %v537 = vmul.f32 %v500, 1.442695
  %v538 = vpow.pop %v537
  %v539 = vmul.f32 %v501, 1.442695
  %v540 = vpow.pop %v539
  %v541 = vmul.f32 %v502, 1.442695
  %v542 = vpow.pop %v541
  %v543 = vmul.f32 %v503, 1.442695
  %v544 = vpow.pop %v543
  %v545 = vmul.f32 %v504, 1.442695
  %v546 = vpow.pop %v545
  %v547 = vmul.f32 %v505, 1.442695
  %v548 = vpow.pop %v547
  %v549 = vmul.f32 %v506, 1.442695
  %v550 = vpow.pop %v549
  %v551 = vmul.f32 %v507, 1.442695
  %v552 = vpow.pop %v551
  %v553 = vmul.f32 %v508, 1.442695
  %v554 = vpow.pop %v553
  %v555 = vmul.f32 %v509, 1.442695
  %v556 = vpow.pop %v555
  %v557 = vmul.f32 %v510, 1.442695
  %v558 = vpow.pop %v557
  %v559 = vmul.f32 %v511, 1.442695
  %v560 = vpow.pop %v559
  %v561 = vmul.f32 %v512, 1.442695
  %v562 = vpow.pop %v561
  %588 = vrot.lane.b32.xlu0 %v514, 111
  %v589 = vpop.permute.xlu0 %588
  %590 = vrot.lane.b32.xlu0 %v516, 111
  %v591 = vpop.permute.xlu0 %590
  %592 = vrot.lane.b32.xlu0 %v518, 111
  %v593 = vpop.permute.xlu0 %592
  %594 = vrot.lane.b32.xlu0 %v520, 111
  %v595 = vpop.permute.xlu0 %594
  %596 = vrot.lane.b32.xlu0 %v522, 111
  %v597 = vpop.permute.xlu0 %596
  %598 = vrot.lane.b32.xlu0 %v524, 111
  %v599 = vpop.permute.xlu0 %598
  %600 = vrot.lane.b32.xlu0 %v526, 111
  %v601 = vpop.permute.xlu0 %600
  %602 = vrot.lane.b32.xlu0 %v528, 111
  %v603 = vpop.permute.xlu0 %602
  %604 = vrot.lane.b32.xlu0 %v530, 111
  %v605 = vpop.permute.xlu0 %604
  %606 = vrot.lane.b32.xlu0 %v532, 111
  %v607 = vpop.permute.xlu0 %606
  %608 = vrot.lane.b32.xlu0 %v534, 111
  %v609 = vpop.permute.xlu0 %608
  %610 = vrot.lane.b32.xlu0 %v536, 111
  %v611 = vpop.permute.xlu0 %610
  %612 = vrot.lane.b32.xlu0 %v538, 111
  %v613 = vpop.permute.xlu0 %612
  %614 = vrot.lane.b32.xlu0 %v540, 111
  %v615 = vpop.permute.xlu0 %614
  %616 = vrot.lane.b32.xlu0 %v542, 111
  %v617 = vpop.permute.xlu0 %616
  %618 = vrot.lane.b32.xlu0 %v544, 111
  %v619 = vpop.permute.xlu0 %618
  %620 = vrot.lane.b32.xlu0 %v546, 111
  %v621 = vpop.permute.xlu0 %620
  %622 = vrot.lane.b32.xlu0 %v548, 111
  %v623 = vpop.permute.xlu0 %622
  %624 = vrot.lane.b32.xlu0 %v550, 111
  %v625 = vpop.permute.xlu0 %624
  %626 = vrot.lane.b32.xlu0 %v552, 111
  %v627 = vpop.permute.xlu0 %626
  %628 = vrot.lane.b32.xlu0 %v554, 111
  %v629 = vpop.permute.xlu0 %628
  %630 = vrot.lane.b32.xlu0 %v556, 111
  %v631 = vpop.permute.xlu0 %630
  %632 = vrot.lane.b32.xlu0 %v558, 111
  %v633 = vpop.permute.xlu0 %632
  %634 = vrot.lane.b32.xlu0 %v560, 111
  %v635 = vpop.permute.xlu0 %634
  %636 = vrot.lane.b32.xlu0 %v562, 111
  %v637 = vpop.permute.xlu0 %636
  %v663 = vsel %vm36, %v589, 0.0
  %664 = vadd.xlane.f32.xlu0 %v663
  %v665 = vpop.xlane.xlu0 %664
  %v666 = vsel %vm36, %v591, 0.0
  %667 = vadd.xlane.f32.xlu0 %v666
  %v668 = vpop.xlane.xlu0 %667
  %v669 = vsel %vm36, %v593, 0.0
  %670 = vadd.xlane.f32.xlu0 %v669
  %v671 = vpop.xlane.xlu0 %670
  %v672 = vsel %vm36, %v595, 0.0
  %673 = vadd.xlane.f32.xlu0 %v672
  %v674 = vpop.xlane.xlu0 %673
  %v675 = vsel %vm36, %v597, 0.0
  %676 = vadd.xlane.f32.xlu0 %v675
  %v677 = vpop.xlane.xlu0 %676
  %v678 = vsel %vm36, %v599, 0.0
  %679 = vadd.xlane.f32.xlu0 %v678
  %v680 = vpop.xlane.xlu0 %679
  %v681 = vsel %vm36, %v601, 0.0
  %682 = vadd.xlane.f32.xlu0 %v681
  %v683 = vpop.xlane.xlu0 %682
  %v684 = vsel %vm36, %v603, 0.0
  %685 = vadd.xlane.f32.xlu0 %v684
  %v686 = vpop.xlane.xlu0 %685
  %v687 = vsel %vm36, %v605, 0.0
  %688 = vadd.xlane.f32.xlu0 %v687
  %v689 = vpop.xlane.xlu0 %688
  %v690 = vsel %vm36, %v607, 0.0
  %691 = vadd.xlane.f32.xlu0 %v690
  %v692 = vpop.xlane.xlu0 %691
  %v693 = vsel %vm36, %v609, 0.0
  %694 = vadd.xlane.f32.xlu0 %v693
  %v695 = vpop.xlane.xlu0 %694
  %v696 = vsel %vm36, %v611, 0.0
  %697 = vadd.xlane.f32.xlu0 %v696
  %v698 = vpop.xlane.xlu0 %697
  %v699 = vsel %vm36, %v613, 0.0
  %700 = vadd.xlane.f32.xlu0 %v699
  %v701 = vpop.xlane.xlu0 %700
  %v702 = vsel %vm36, %v615, 0.0
  %703 = vadd.xlane.f32.xlu0 %v702
  %v704 = vpop.xlane.xlu0 %703
  %v705 = vsel %vm36, %v617, 0.0
  %706 = vadd.xlane.f32.xlu0 %v705
  %v707 = vpop.xlane.xlu0 %706
  %v708 = vsel %vm36, %v619, 0.0
  %709 = vadd.xlane.f32.xlu0 %v708
  %v710 = vpop.xlane.xlu0 %709
  %v711 = vsel %vm36, %v621, 0.0
  %712 = vadd.xlane.f32.xlu0 %v711
  %v713 = vpop.xlane.xlu0 %712
  %v714 = vsel %vm36, %v623, 0.0
  %715 = vadd.xlane.f32.xlu0 %v714
  %v716 = vpop.xlane.xlu0 %715
  %v717 = vsel %vm36, %v625, 0.0
  %718 = vadd.xlane.f32.xlu0 %v717
  %v719 = vpop.xlane.xlu0 %718
  %v720 = vsel %vm36, %v627, 0.0
  %721 = vadd.xlane.f32.xlu0 %v720
  %v722 = vpop.xlane.xlu0 %721
  %v723 = vsel %vm36, %v629, 0.0
  %724 = vadd.xlane.f32.xlu0 %v723
  %v725 = vpop.xlane.xlu0 %724
  %v726 = vsel %vm36, %v631, 0.0
  %727 = vadd.xlane.f32.xlu0 %v726
  %v728 = vpop.xlane.xlu0 %727
  %v729 = vsel %vm36, %v633, 0.0
  %730 = vadd.xlane.f32.xlu0 %v729
  %v731 = vpop.xlane.xlu0 %730
  %v732 = vsel %vm36, %v635, 0.0
  %733 = vadd.xlane.f32.xlu0 %v732
  %v734 = vpop.xlane.xlu0 %733
  %v735 = vsel %vm36, %v637, 0.0
  %736 = vadd.xlane.f32.xlu0 %v735
  %v737 = vpop.xlane.xlu0 %736
  %739 = vrot.lane.b32.xlu0 %v35, 17
  %v740 = vpop.permute.xlu0 %739
  %v742 = vmul.f32 %v514, %v740
  %v743 = vmul.f32 %v516, %v740
  %v744 = vmul.f32 %v518, %v740
  %v745 = vmul.f32 %v520, %v740
  %v746 = vmul.f32 %v522, %v740
  %v747 = vmul.f32 %v524, %v740
  %v748 = vmul.f32 %v526, %v740
  %v749 = vmul.f32 %v528, %v740
  %v750 = vmul.f32 %v530, %v740
  %v751 = vmul.f32 %v532, %v740
  %v752 = vmul.f32 %v534, %v740
  %v753 = vmul.f32 %v536, %v740
  %v754 = vmul.f32 %v538, %v740
  %v755 = vmul.f32 %v540, %v740
  %v756 = vmul.f32 %v542, %v740
  %v757 = vmul.f32 %v544, %v740
  %v758 = vmul.f32 %v546, %v740
  %v759 = vmul.f32 %v548, %v740
  %v760 = vmul.f32 %v550, %v740
  %v761 = vmul.f32 %v552, %v740
  %v762 = vmul.f32 %v554, %v740
  %v763 = vmul.f32 %v556, %v740
  %v764 = vmul.f32 %v558, %v740
  %v765 = vmul.f32 %v560, %v740
  %v766 = vmul.f32 %v562, %v740
  %792 = vrot.lane.b32.xlu0 %v742, 111
  %v793 = vpop.permute.xlu0 %792
  %794 = vrot.lane.b32.xlu0 %v743, 111
  %v795 = vpop.permute.xlu0 %794
  %796 = vrot.lane.b32.xlu0 %v744, 111
  %v797 = vpop.permute.xlu0 %796
  %798 = vrot.lane.b32.xlu0 %v745, 111
  %v799 = vpop.permute.xlu0 %798
  %800 = vrot.lane.b32.xlu0 %v746, 111
  %v801 = vpop.permute.xlu0 %800
  %802 = vrot.lane.b32.xlu0 %v747, 111
  %v803 = vpop.permute.xlu0 %802
  %804 = vrot.lane.b32.xlu0 %v748, 111
  %v805 = vpop.permute.xlu0 %804
  %806 = vrot.lane.b32.xlu0 %v749, 111
  %v807 = vpop.permute.xlu0 %806
  %808 = vrot.lane.b32.xlu0 %v750, 111
  %v809 = vpop.permute.xlu0 %808
  %810 = vrot.lane.b32.xlu0 %v751, 111
  %v811 = vpop.permute.xlu0 %810
  %812 = vrot.lane.b32.xlu0 %v752, 111
  %v813 = vpop.permute.xlu0 %812
  %814 = vrot.lane.b32.xlu0 %v753, 111
  %v815 = vpop.permute.xlu0 %814
  %816 = vrot.lane.b32.xlu0 %v754, 111
  %v817 = vpop.permute.xlu0 %816
  %818 = vrot.lane.b32.xlu0 %v755, 111
  %v819 = vpop.permute.xlu0 %818
  %820 = vrot.lane.b32.xlu0 %v756, 111
  %v821 = vpop.permute.xlu0 %820
  %822 = vrot.lane.b32.xlu0 %v757, 111
  %v823 = vpop.permute.xlu0 %822
  %824 = vrot.lane.b32.xlu0 %v758, 111
  %v825 = vpop.permute.xlu0 %824
  %826 = vrot.lane.b32.xlu0 %v759, 111
  %v827 = vpop.permute.xlu0 %826
  %828 = vrot.lane.b32.xlu0 %v760, 111
  %v829 = vpop.permute.xlu0 %828
  %830 = vrot.lane.b32.xlu0 %v761, 111
  %v831 = vpop.permute.xlu0 %830
  %832 = vrot.lane.b32.xlu0 %v762, 111
  %v833 = vpop.permute.xlu0 %832
  %834 = vrot.lane.b32.xlu0 %v763, 111
  %v835 = vpop.permute.xlu0 %834
  %836 = vrot.lane.b32.xlu0 %v764, 111
  %v837 = vpop.permute.xlu0 %836
  %838 = vrot.lane.b32.xlu0 %v765, 111
  %v839 = vpop.permute.xlu0 %838
  %840 = vrot.lane.b32.xlu0 %v766, 111
  %v841 = vpop.permute.xlu0 %840
  %v867 = vsel %vm36, %v793, 0.0
  %868 = vadd.xlane.f32.xlu0 %v867
  %v869 = vpop.xlane.xlu0 %868
  %v870 = vsel %vm36, %v795, 0.0
  %871 = vadd.xlane.f32.xlu0 %v870
  %v872 = vpop.xlane.xlu0 %871
  %v873 = vsel %vm36, %v797, 0.0
  %874 = vadd.xlane.f32.xlu0 %v873
  %v875 = vpop.xlane.xlu0 %874
  %v876 = vsel %vm36, %v799, 0.0
  %877 = vadd.xlane.f32.xlu0 %v876
  %v878 = vpop.xlane.xlu0 %877
  %v879 = vsel %vm36, %v801, 0.0
  %880 = vadd.xlane.f32.xlu0 %v879
  %v881 = vpop.xlane.xlu0 %880
  %v882 = vsel %vm36, %v803, 0.0
  %883 = vadd.xlane.f32.xlu0 %v882
  %v884 = vpop.xlane.xlu0 %883
  %v885 = vsel %vm36, %v805, 0.0
  %886 = vadd.xlane.f32.xlu0 %v885
  %v887 = vpop.xlane.xlu0 %886
  %v888 = vsel %vm36, %v807, 0.0
  %889 = vadd.xlane.f32.xlu0 %v888
  %v890 = vpop.xlane.xlu0 %889
  %v891 = vsel %vm36, %v809, 0.0
  %892 = vadd.xlane.f32.xlu0 %v891
  %v893 = vpop.xlane.xlu0 %892
  %v894 = vsel %vm36, %v811, 0.0
  %895 = vadd.xlane.f32.xlu0 %v894
  %v896 = vpop.xlane.xlu0 %895
  %v897 = vsel %vm36, %v813, 0.0
  %898 = vadd.xlane.f32.xlu0 %v897
  %v899 = vpop.xlane.xlu0 %898
  %v900 = vsel %vm36, %v815, 0.0
  %901 = vadd.xlane.f32.xlu0 %v900
  %v902 = vpop.xlane.xlu0 %901
  %v903 = vsel %vm36, %v817, 0.0
  %904 = vadd.xlane.f32.xlu0 %v903
  %v905 = vpop.xlane.xlu0 %904
  %v906 = vsel %vm36, %v819, 0.0
  %907 = vadd.xlane.f32.xlu0 %v906
  %v908 = vpop.xlane.xlu0 %907
  %v909 = vsel %vm36, %v821, 0.0
  %910 = vadd.xlane.f32.xlu0 %v909
  %v911 = vpop.xlane.xlu0 %910
  %v912 = vsel %vm36, %v823, 0.0
  %913 = vadd.xlane.f32.xlu0 %v912
  %v914 = vpop.xlane.xlu0 %913
  %v915 = vsel %vm36, %v825, 0.0
  %916 = vadd.xlane.f32.xlu0 %v915
  %v917 = vpop.xlane.xlu0 %916
  %v918 = vsel %vm36, %v827, 0.0
  %919 = vadd.xlane.f32.xlu0 %v918
  %v920 = vpop.xlane.xlu0 %919
  %v921 = vsel %vm36, %v829, 0.0
  %922 = vadd.xlane.f32.xlu0 %v921
  %v923 = vpop.xlane.xlu0 %922
  %v924 = vsel %vm36, %v831, 0.0
  %925 = vadd.xlane.f32.xlu0 %v924
  %v926 = vpop.xlane.xlu0 %925
  %v927 = vsel %vm36, %v833, 0.0
  %928 = vadd.xlane.f32.xlu0 %v927
  %v929 = vpop.xlane.xlu0 %928
  %v930 = vsel %vm36, %v835, 0.0
  %931 = vadd.xlane.f32.xlu0 %v930
  %v932 = vpop.xlane.xlu0 %931
  %v933 = vsel %vm36, %v837, 0.0
  %934 = vadd.xlane.f32.xlu0 %v933
  %v935 = vpop.xlane.xlu0 %934
  %v936 = vsel %vm36, %v839, 0.0
  %937 = vadd.xlane.f32.xlu0 %v936
  %v938 = vpop.xlane.xlu0 %937
  %v939 = vsel %vm36, %v841, 0.0
  %940 = vadd.xlane.f32.xlu0 %v939
  %v941 = vpop.xlane.xlu0 %940
  %v942 = vrcp.pop %v665
  %v943 = vmul.f32 %v869, %v942
  %v944 = vrcp.pop %v668
  %v945 = vmul.f32 %v872, %v944
  %v946 = vrcp.pop %v671
  %v947 = vmul.f32 %v875, %v946
  %v948 = vrcp.pop %v674
  %v949 = vmul.f32 %v878, %v948
  %v950 = vrcp.pop %v677
  %v951 = vmul.f32 %v881, %v950
  %v952 = vrcp.pop %v680
  %v953 = vmul.f32 %v884, %v952
  %v954 = vrcp.pop %v683
  %v955 = vmul.f32 %v887, %v954
  %v956 = vrcp.pop %v686
  %v957 = vmul.f32 %v890, %v956
  %v958 = vrcp.pop %v689
  %v959 = vmul.f32 %v893, %v958
  %v960 = vrcp.pop %v692
  %v961 = vmul.f32 %v896, %v960
  %v962 = vrcp.pop %v695
  %v963 = vmul.f32 %v899, %v962
  %v964 = vrcp.pop %v698
  %v965 = vmul.f32 %v902, %v964
  %v966 = vrcp.pop %v701
  %v967 = vmul.f32 %v905, %v966
  %v968 = vrcp.pop %v704
  %v969 = vmul.f32 %v908, %v968
  %v970 = vrcp.pop %v707
  %v971 = vmul.f32 %v911, %v970
  %v972 = vrcp.pop %v710
  %v973 = vmul.f32 %v914, %v972
  %v974 = vrcp.pop %v713
  %v975 = vmul.f32 %v917, %v974
  %v976 = vrcp.pop %v716
  %v977 = vmul.f32 %v920, %v976
  %v978 = vrcp.pop %v719
  %v979 = vmul.f32 %v923, %v978
  %v980 = vrcp.pop %v722
  %v981 = vmul.f32 %v926, %v980
  %v982 = vrcp.pop %v725
  %v983 = vmul.f32 %v929, %v982
  %v984 = vrcp.pop %v728
  %v985 = vmul.f32 %v932, %v984
  %v986 = vrcp.pop %v731
  %v987 = vmul.f32 %v935, %v986
  %v988 = vrcp.pop %v734
  %v989 = vmul.f32 %v938, %v988
  %v990 = vrcp.pop %v737
  %v991 = vmul.f32 %v941, %v990
  %vm992 = vcmask 417040
  %v993 = vsel %vm992, %v8, -inf
  %994 = vmax.xlane.f32.xlu0 %v993
  %v995 = vpop.xlane.xlu0 %994
  %v996 = vsel %vm992, %v9, -inf
  %997 = vmax.xlane.f32.xlu0 %v996
  %v998 = vpop.xlane.xlu0 %997
  %v999 = vsel %vm992, %v10, -inf
  %1000 = vmax.xlane.f32.xlu0 %v999
  %v1001 = vpop.xlane.xlu0 %1000
  %v1002 = vsel %vm992, %v11, -inf
  %1003 = vmax.xlane.f32.xlu0 %v1002
  %v1004 = vpop.xlane.xlu0 %1003
  %v1005 = vsel %vm992, %v12, -inf
  %1006 = vmax.xlane.f32.xlu0 %v1005
  %v1007 = vpop.xlane.xlu0 %1006
  %v1008 = vsel %vm992, %v13, -inf
  %1009 = vmax.xlane.f32.xlu0 %v1008
  %v1010 = vpop.xlane.xlu0 %1009
  %v1011 = vsel %vm992, %v14, -inf
  %1012 = vmax.xlane.f32.xlu0 %v1011
  %v1013 = vpop.xlane.xlu0 %1012
  %v1014 = vsel %vm992, %v15, -inf
  %1015 = vmax.xlane.f32.xlu0 %v1014
  %v1016 = vpop.xlane.xlu0 %1015
  %v1017 = vsel %vm992, %v16, -inf
  %1018 = vmax.xlane.f32.xlu0 %v1017
  %v1019 = vpop.xlane.xlu0 %1018
  %v1020 = vsel %vm992, %v17, -inf
  %1021 = vmax.xlane.f32.xlu0 %v1020
  %v1022 = vpop.xlane.xlu0 %1021
  %v1023 = vsel %vm992, %v18, -inf
  %1024 = vmax.xlane.f32.xlu0 %v1023
  %v1025 = vpop.xlane.xlu0 %1024
  %v1026 = vsel %vm992, %v19, -inf
  %1027 = vmax.xlane.f32.xlu0 %v1026
  %v1028 = vpop.xlane.xlu0 %1027
  %v1029 = vsel %vm992, %v20, -inf
  %1030 = vmax.xlane.f32.xlu0 %v1029
  %v1031 = vpop.xlane.xlu0 %1030
  %v1032 = vsel %vm992, %v21, -inf
  %1033 = vmax.xlane.f32.xlu0 %v1032
  %v1034 = vpop.xlane.xlu0 %1033
  %v1035 = vsel %vm992, %v22, -inf
  %1036 = vmax.xlane.f32.xlu0 %v1035
  %v1037 = vpop.xlane.xlu0 %1036
  %v1038 = vsel %vm992, %v23, -inf
  %1039 = vmax.xlane.f32.xlu0 %v1038
  %v1040 = vpop.xlane.xlu0 %1039
  %v1041 = vsel %vm992, %v24, -inf
  %1042 = vmax.xlane.f32.xlu0 %v1041
  %v1043 = vpop.xlane.xlu0 %1042
  %v1044 = vsel %vm992, %v25, -inf
  %1045 = vmax.xlane.f32.xlu0 %v1044
  %v1046 = vpop.xlane.xlu0 %1045
  %v1047 = vsel %vm992, %v26, -inf
  %1048 = vmax.xlane.f32.xlu0 %v1047
  %v1049 = vpop.xlane.xlu0 %1048
  %v1050 = vsel %vm992, %v27, -inf
  %1051 = vmax.xlane.f32.xlu0 %v1050
  %v1052 = vpop.xlane.xlu0 %1051
  %v1053 = vsel %vm992, %v28, -inf
  %1054 = vmax.xlane.f32.xlu0 %v1053
  %v1055 = vpop.xlane.xlu0 %1054
  %v1056 = vsel %vm992, %v29, -inf
  %1057 = vmax.xlane.f32.xlu0 %v1056
  %v1058 = vpop.xlane.xlu0 %1057
  %v1059 = vsel %vm992, %v30, -inf
  %1060 = vmax.xlane.f32.xlu0 %v1059
  %v1061 = vpop.xlane.xlu0 %1060
  %v1062 = vsel %vm992, %v31, -inf
  %1063 = vmax.xlane.f32.xlu0 %v1062
  %v1064 = vpop.xlane.xlu0 %1063
  %v1065 = vsel %vm992, %v32, -inf
  %1066 = vmax.xlane.f32.xlu0 %v1065
  %v1067 = vpop.xlane.xlu0 %1066
  %v1068 = vsub.f32 %v8, %v995
  %v1069 = vsub.f32 %v9, %v998
  %v1070 = vsub.f32 %v10, %v1001
  %v1071 = vsub.f32 %v11, %v1004
  %v1072 = vsub.f32 %v12, %v1007
  %v1073 = vsub.f32 %v13, %v1010
  %v1074 = vsub.f32 %v14, %v1013
  %v1075 = vsub.f32 %v15, %v1016
  %v1076 = vsub.f32 %v16, %v1019
  %v1077 = vsub.f32 %v17, %v1022
  %v1078 = vsub.f32 %v18, %v1025
  %v1079 = vsub.f32 %v19, %v1028
  %v1080 = vsub.f32 %v20, %v1031
  %v1081 = vsub.f32 %v21, %v1034
  %v1082 = vsub.f32 %v22, %v1037
  %v1083 = vsub.f32 %v23, %v1040
  %v1084 = vsub.f32 %v24, %v1043
  %v1085 = vsub.f32 %v25, %v1046
  %v1086 = vsub.f32 %v26, %v1049
  %v1087 = vsub.f32 %v27, %v1052
  %v1088 = vsub.f32 %v28, %v1055
  %v1089 = vsub.f32 %v29, %v1058
  %v1090 = vsub.f32 %v30, %v1061
  %v1091 = vsub.f32 %v31, %v1064
  %v1092 = vsub.f32 %v32, %v1067
  %v1093 = vmul.f32 %v1068, 1.442695
  %v1094 = vpow.pop %v1093
  %v1095 = vmul.f32 %v1069, 1.442695
  %v1096 = vpow.pop %v1095
  %v1097 = vmul.f32 %v1070, 1.442695
  %v1098 = vpow.pop %v1097
  %v1099 = vmul.f32 %v1071, 1.442695
  %v1100 = vpow.pop %v1099
  %v1101 = vmul.f32 %v1072, 1.442695
  %v1102 = vpow.pop %v1101
  %v1103 = vmul.f32 %v1073, 1.442695
  %v1104 = vpow.pop %v1103
  %v1105 = vmul.f32 %v1074, 1.442695
  %v1106 = vpow.pop %v1105
  %v1107 = vmul.f32 %v1075, 1.442695
  %v1108 = vpow.pop %v1107
  %v1109 = vmul.f32 %v1076, 1.442695
  %v1110 = vpow.pop %v1109
  %v1111 = vmul.f32 %v1077, 1.442695
  %v1112 = vpow.pop %v1111
  %v1113 = vmul.f32 %v1078, 1.442695
  %v1114 = vpow.pop %v1113
  %v1115 = vmul.f32 %v1079, 1.442695
  %v1116 = vpow.pop %v1115
  %v1117 = vmul.f32 %v1080, 1.442695
  %v1118 = vpow.pop %v1117
  %v1119 = vmul.f32 %v1081, 1.442695
  %v1120 = vpow.pop %v1119
  %v1121 = vmul.f32 %v1082, 1.442695
  %v1122 = vpow.pop %v1121
  %v1123 = vmul.f32 %v1083, 1.442695
  %v1124 = vpow.pop %v1123
  %v1125 = vmul.f32 %v1084, 1.442695
  %v1126 = vpow.pop %v1125
  %v1127 = vmul.f32 %v1085, 1.442695
  %v1128 = vpow.pop %v1127
  %v1129 = vmul.f32 %v1086, 1.442695
  %v1130 = vpow.pop %v1129
  %v1131 = vmul.f32 %v1087, 1.442695
  %v1132 = vpow.pop %v1131
  %v1133 = vmul.f32 %v1088, 1.442695
  %v1134 = vpow.pop %v1133
  %v1135 = vmul.f32 %v1089, 1.442695
  %v1136 = vpow.pop %v1135
  %v1137 = vmul.f32 %v1090, 1.442695
  %v1138 = vpow.pop %v1137
  %v1139 = vmul.f32 %v1091, 1.442695
  %v1140 = vpow.pop %v1139
  %v1141 = vmul.f32 %v1092, 1.442695
  %v1142 = vpow.pop %v1141
  %1168 = vrot.lane.b32.xlu0 %v1094, 94
  %v1169 = vpop.permute.xlu0 %1168
  %1170 = vrot.lane.b32.xlu0 %v1096, 94
  %v1171 = vpop.permute.xlu0 %1170
  %1172 = vrot.lane.b32.xlu0 %v1098, 94
  %v1173 = vpop.permute.xlu0 %1172
  %1174 = vrot.lane.b32.xlu0 %v1100, 94
  %v1175 = vpop.permute.xlu0 %1174
  %1176 = vrot.lane.b32.xlu0 %v1102, 94
  %v1177 = vpop.permute.xlu0 %1176
  %1178 = vrot.lane.b32.xlu0 %v1104, 94
  %v1179 = vpop.permute.xlu0 %1178
  %1180 = vrot.lane.b32.xlu0 %v1106, 94
  %v1181 = vpop.permute.xlu0 %1180
  %1182 = vrot.lane.b32.xlu0 %v1108, 94
  %v1183 = vpop.permute.xlu0 %1182
  %1184 = vrot.lane.b32.xlu0 %v1110, 94
  %v1185 = vpop.permute.xlu0 %1184
  %1186 = vrot.lane.b32.xlu0 %v1112, 94
  %v1187 = vpop.permute.xlu0 %1186
  %1188 = vrot.lane.b32.xlu0 %v1114, 94
  %v1189 = vpop.permute.xlu0 %1188
  %1190 = vrot.lane.b32.xlu0 %v1116, 94
  %v1191 = vpop.permute.xlu0 %1190
  %1192 = vrot.lane.b32.xlu0 %v1118, 94
  %v1193 = vpop.permute.xlu0 %1192
  %1194 = vrot.lane.b32.xlu0 %v1120, 94
  %v1195 = vpop.permute.xlu0 %1194
  %1196 = vrot.lane.b32.xlu0 %v1122, 94
  %v1197 = vpop.permute.xlu0 %1196
  %1198 = vrot.lane.b32.xlu0 %v1124, 94
  %v1199 = vpop.permute.xlu0 %1198
  %1200 = vrot.lane.b32.xlu0 %v1126, 94
  %v1201 = vpop.permute.xlu0 %1200
  %1202 = vrot.lane.b32.xlu0 %v1128, 94
  %v1203 = vpop.permute.xlu0 %1202
  %1204 = vrot.lane.b32.xlu0 %v1130, 94
  %v1205 = vpop.permute.xlu0 %1204
  %1206 = vrot.lane.b32.xlu0 %v1132, 94
  %v1207 = vpop.permute.xlu0 %1206
  %1208 = vrot.lane.b32.xlu0 %v1134, 94
  %v1209 = vpop.permute.xlu0 %1208
  %1210 = vrot.lane.b32.xlu0 %v1136, 94
  %v1211 = vpop.permute.xlu0 %1210
  %1212 = vrot.lane.b32.xlu0 %v1138, 94
  %v1213 = vpop.permute.xlu0 %1212
  %1214 = vrot.lane.b32.xlu0 %v1140, 94
  %v1215 = vpop.permute.xlu0 %1214
  %1216 = vrot.lane.b32.xlu0 %v1142, 94
  %v1217 = vpop.permute.xlu0 %1216
  %v1243 = vsel %vm36, %v1169, 0.0
  %1244 = vadd.xlane.f32.xlu0 %v1243
  %v1245 = vpop.xlane.xlu0 %1244
  %v1246 = vsel %vm36, %v1171, 0.0
  %1247 = vadd.xlane.f32.xlu0 %v1246
  %v1248 = vpop.xlane.xlu0 %1247
  %v1249 = vsel %vm36, %v1173, 0.0
  %1250 = vadd.xlane.f32.xlu0 %v1249
  %v1251 = vpop.xlane.xlu0 %1250
  %v1252 = vsel %vm36, %v1175, 0.0
  %1253 = vadd.xlane.f32.xlu0 %v1252
  %v1254 = vpop.xlane.xlu0 %1253
  %v1255 = vsel %vm36, %v1177, 0.0
  %1256 = vadd.xlane.f32.xlu0 %v1255
  %v1257 = vpop.xlane.xlu0 %1256
  %v1258 = vsel %vm36, %v1179, 0.0
  %1259 = vadd.xlane.f32.xlu0 %v1258
  %v1260 = vpop.xlane.xlu0 %1259
  %v1261 = vsel %vm36, %v1181, 0.0
  %1262 = vadd.xlane.f32.xlu0 %v1261
  %v1263 = vpop.xlane.xlu0 %1262
  %v1264 = vsel %vm36, %v1183, 0.0
  %1265 = vadd.xlane.f32.xlu0 %v1264
  %v1266 = vpop.xlane.xlu0 %1265
  %v1267 = vsel %vm36, %v1185, 0.0
  %1268 = vadd.xlane.f32.xlu0 %v1267
  %v1269 = vpop.xlane.xlu0 %1268
  %v1270 = vsel %vm36, %v1187, 0.0
  %1271 = vadd.xlane.f32.xlu0 %v1270
  %v1272 = vpop.xlane.xlu0 %1271
  %v1273 = vsel %vm36, %v1189, 0.0
  %1274 = vadd.xlane.f32.xlu0 %v1273
  %v1275 = vpop.xlane.xlu0 %1274
  %v1276 = vsel %vm36, %v1191, 0.0
  %1277 = vadd.xlane.f32.xlu0 %v1276
  %v1278 = vpop.xlane.xlu0 %1277
  %v1279 = vsel %vm36, %v1193, 0.0
  %1280 = vadd.xlane.f32.xlu0 %v1279
  %v1281 = vpop.xlane.xlu0 %1280
  %v1282 = vsel %vm36, %v1195, 0.0
  %1283 = vadd.xlane.f32.xlu0 %v1282
  %v1284 = vpop.xlane.xlu0 %1283
  %v1285 = vsel %vm36, %v1197, 0.0
  %1286 = vadd.xlane.f32.xlu0 %v1285
  %v1287 = vpop.xlane.xlu0 %1286
  %v1288 = vsel %vm36, %v1199, 0.0
  %1289 = vadd.xlane.f32.xlu0 %v1288
  %v1290 = vpop.xlane.xlu0 %1289
  %v1291 = vsel %vm36, %v1201, 0.0
  %1292 = vadd.xlane.f32.xlu0 %v1291
  %v1293 = vpop.xlane.xlu0 %1292
  %v1294 = vsel %vm36, %v1203, 0.0
  %1295 = vadd.xlane.f32.xlu0 %v1294
  %v1296 = vpop.xlane.xlu0 %1295
  %v1297 = vsel %vm36, %v1205, 0.0
  %1298 = vadd.xlane.f32.xlu0 %v1297
  %v1299 = vpop.xlane.xlu0 %1298
  %v1300 = vsel %vm36, %v1207, 0.0
  %1301 = vadd.xlane.f32.xlu0 %v1300
  %v1302 = vpop.xlane.xlu0 %1301
  %v1303 = vsel %vm36, %v1209, 0.0
  %1304 = vadd.xlane.f32.xlu0 %v1303
  %v1305 = vpop.xlane.xlu0 %1304
  %v1306 = vsel %vm36, %v1211, 0.0
  %1307 = vadd.xlane.f32.xlu0 %v1306
  %v1308 = vpop.xlane.xlu0 %1307
  %v1309 = vsel %vm36, %v1213, 0.0
  %1310 = vadd.xlane.f32.xlu0 %v1309
  %v1311 = vpop.xlane.xlu0 %1310
  %v1312 = vsel %vm36, %v1215, 0.0
  %1313 = vadd.xlane.f32.xlu0 %v1312
  %v1314 = vpop.xlane.xlu0 %1313
  %v1315 = vsel %vm36, %v1217, 0.0
  %1316 = vadd.xlane.f32.xlu0 %v1315
  %v1317 = vpop.xlane.xlu0 %1316
  %1318 = vrot.lane.b32.xlu0 %v35, 34
  %v1319 = vpop.permute.xlu0 %1318
  %v1321 = vmul.f32 %v1094, %v1319
  %v1322 = vmul.f32 %v1096, %v1319
  %v1323 = vmul.f32 %v1098, %v1319
  %v1324 = vmul.f32 %v1100, %v1319
  %v1325 = vmul.f32 %v1102, %v1319
  %v1326 = vmul.f32 %v1104, %v1319
  %v1327 = vmul.f32 %v1106, %v1319
  %v1328 = vmul.f32 %v1108, %v1319
  %v1329 = vmul.f32 %v1110, %v1319
  %v1330 = vmul.f32 %v1112, %v1319
  %v1331 = vmul.f32 %v1114, %v1319
  %v1332 = vmul.f32 %v1116, %v1319
  %v1333 = vmul.f32 %v1118, %v1319
  %v1334 = vmul.f32 %v1120, %v1319
  %v1335 = vmul.f32 %v1122, %v1319
  %v1336 = vmul.f32 %v1124, %v1319
  %v1337 = vmul.f32 %v1126, %v1319
  %v1338 = vmul.f32 %v1128, %v1319
  %v1339 = vmul.f32 %v1130, %v1319
  %v1340 = vmul.f32 %v1132, %v1319
  %v1341 = vmul.f32 %v1134, %v1319
  %v1342 = vmul.f32 %v1136, %v1319
  %v1343 = vmul.f32 %v1138, %v1319
  %v1344 = vmul.f32 %v1140, %v1319
  %v1345 = vmul.f32 %v1142, %v1319
  %1371 = vrot.lane.b32.xlu0 %v1321, 94
  %v1372 = vpop.permute.xlu0 %1371
  %1373 = vrot.lane.b32.xlu0 %v1322, 94
  %v1374 = vpop.permute.xlu0 %1373
  %1375 = vrot.lane.b32.xlu0 %v1323, 94
  %v1376 = vpop.permute.xlu0 %1375
  %1377 = vrot.lane.b32.xlu0 %v1324, 94
  %v1378 = vpop.permute.xlu0 %1377
  %1379 = vrot.lane.b32.xlu0 %v1325, 94
  %v1380 = vpop.permute.xlu0 %1379
  %1381 = vrot.lane.b32.xlu0 %v1326, 94
  %v1382 = vpop.permute.xlu0 %1381
  %1383 = vrot.lane.b32.xlu0 %v1327, 94
  %v1384 = vpop.permute.xlu0 %1383
  %1385 = vrot.lane.b32.xlu0 %v1328, 94
  %v1386 = vpop.permute.xlu0 %1385
  %1387 = vrot.lane.b32.xlu0 %v1329, 94
  %v1388 = vpop.permute.xlu0 %1387
  %1389 = vrot.lane.b32.xlu0 %v1330, 94
  %v1390 = vpop.permute.xlu0 %1389
  %1391 = vrot.lane.b32.xlu0 %v1331, 94
  %v1392 = vpop.permute.xlu0 %1391
  %1393 = vrot.lane.b32.xlu0 %v1332, 94
  %v1394 = vpop.permute.xlu0 %1393
  %1395 = vrot.lane.b32.xlu0 %v1333, 94
  %v1396 = vpop.permute.xlu0 %1395
  %1397 = vrot.lane.b32.xlu0 %v1334, 94
  %v1398 = vpop.permute.xlu0 %1397
  %1399 = vrot.lane.b32.xlu0 %v1335, 94
  %v1400 = vpop.permute.xlu0 %1399
  %1401 = vrot.lane.b32.xlu0 %v1336, 94
  %v1402 = vpop.permute.xlu0 %1401
  %1403 = vrot.lane.b32.xlu0 %v1337, 94
  %v1404 = vpop.permute.xlu0 %1403
  %1405 = vrot.lane.b32.xlu0 %v1338, 94
  %v1406 = vpop.permute.xlu0 %1405
  %1407 = vrot.lane.b32.xlu0 %v1339, 94
  %v1408 = vpop.permute.xlu0 %1407
  %1409 = vrot.lane.b32.xlu0 %v1340, 94
  %v1410 = vpop.permute.xlu0 %1409
  %1411 = vrot.lane.b32.xlu0 %v1341, 94
  %v1412 = vpop.permute.xlu0 %1411
  %1413 = vrot.lane.b32.xlu0 %v1342, 94
  %v1414 = vpop.permute.xlu0 %1413
  %1415 = vrot.lane.b32.xlu0 %v1343, 94
  %v1416 = vpop.permute.xlu0 %1415
  %1417 = vrot.lane.b32.xlu0 %v1344, 94
  %v1418 = vpop.permute.xlu0 %1417
  %1419 = vrot.lane.b32.xlu0 %v1345, 94
  %v1420 = vpop.permute.xlu0 %1419
  %v1446 = vsel %vm36, %v1372, 0.0
  %1447 = vadd.xlane.f32.xlu0 %v1446
  %v1448 = vpop.xlane.xlu0 %1447
  %v1449 = vsel %vm36, %v1374, 0.0
  %1450 = vadd.xlane.f32.xlu0 %v1449
  %v1451 = vpop.xlane.xlu0 %1450
  %v1452 = vsel %vm36, %v1376, 0.0
  %1453 = vadd.xlane.f32.xlu0 %v1452
  %v1454 = vpop.xlane.xlu0 %1453
  %v1455 = vsel %vm36, %v1378, 0.0
  %1456 = vadd.xlane.f32.xlu0 %v1455
  %v1457 = vpop.xlane.xlu0 %1456
  %v1458 = vsel %vm36, %v1380, 0.0
  %1459 = vadd.xlane.f32.xlu0 %v1458
  %v1460 = vpop.xlane.xlu0 %1459
  %v1461 = vsel %vm36, %v1382, 0.0
  %1462 = vadd.xlane.f32.xlu0 %v1461
  %v1463 = vpop.xlane.xlu0 %1462
  %v1464 = vsel %vm36, %v1384, 0.0
  %1465 = vadd.xlane.f32.xlu0 %v1464
  %v1466 = vpop.xlane.xlu0 %1465
  %v1467 = vsel %vm36, %v1386, 0.0
  %1468 = vadd.xlane.f32.xlu0 %v1467
  %v1469 = vpop.xlane.xlu0 %1468
  %v1470 = vsel %vm36, %v1388, 0.0
  %1471 = vadd.xlane.f32.xlu0 %v1470
  %v1472 = vpop.xlane.xlu0 %1471
  %v1473 = vsel %vm36, %v1390, 0.0
  %1474 = vadd.xlane.f32.xlu0 %v1473
  %v1475 = vpop.xlane.xlu0 %1474
  %v1476 = vsel %vm36, %v1392, 0.0
  %1477 = vadd.xlane.f32.xlu0 %v1476
  %v1478 = vpop.xlane.xlu0 %1477
  %v1479 = vsel %vm36, %v1394, 0.0
  %1480 = vadd.xlane.f32.xlu0 %v1479
  %v1481 = vpop.xlane.xlu0 %1480
  %v1482 = vsel %vm36, %v1396, 0.0
  %1483 = vadd.xlane.f32.xlu0 %v1482
  %v1484 = vpop.xlane.xlu0 %1483
  %v1485 = vsel %vm36, %v1398, 0.0
  %1486 = vadd.xlane.f32.xlu0 %v1485
  %v1487 = vpop.xlane.xlu0 %1486
  %v1488 = vsel %vm36, %v1400, 0.0
  %1489 = vadd.xlane.f32.xlu0 %v1488
  %v1490 = vpop.xlane.xlu0 %1489
  %v1491 = vsel %vm36, %v1402, 0.0
  %1492 = vadd.xlane.f32.xlu0 %v1491
  %v1493 = vpop.xlane.xlu0 %1492
  %v1494 = vsel %vm36, %v1404, 0.0
  %1495 = vadd.xlane.f32.xlu0 %v1494
  %v1496 = vpop.xlane.xlu0 %1495
  %v1497 = vsel %vm36, %v1406, 0.0
  %1498 = vadd.xlane.f32.xlu0 %v1497
  %v1499 = vpop.xlane.xlu0 %1498
  %v1500 = vsel %vm36, %v1408, 0.0
  %1501 = vadd.xlane.f32.xlu0 %v1500
  %v1502 = vpop.xlane.xlu0 %1501
  %v1503 = vsel %vm36, %v1410, 0.0
  %1504 = vadd.xlane.f32.xlu0 %v1503
  %v1505 = vpop.xlane.xlu0 %1504
  %v1506 = vsel %vm36, %v1412, 0.0
  %1507 = vadd.xlane.f32.xlu0 %v1506
  %v1508 = vpop.xlane.xlu0 %1507
  %v1509 = vsel %vm36, %v1414, 0.0
  %1510 = vadd.xlane.f32.xlu0 %v1509
  %v1511 = vpop.xlane.xlu0 %1510
  %v1512 = vsel %vm36, %v1416, 0.0
  %1513 = vadd.xlane.f32.xlu0 %v1512
  %v1514 = vpop.xlane.xlu0 %1513
  %v1515 = vsel %vm36, %v1418, 0.0
  %1516 = vadd.xlane.f32.xlu0 %v1515
  %v1517 = vpop.xlane.xlu0 %1516
  %v1518 = vsel %vm36, %v1420, 0.0
  %1519 = vadd.xlane.f32.xlu0 %v1518
  %v1520 = vpop.xlane.xlu0 %1519
  %v1521 = vrcp.pop %v1245
  %v1522 = vmul.f32 %v1448, %v1521
  %v1523 = vrcp.pop %v1248
  %v1524 = vmul.f32 %v1451, %v1523
  %v1525 = vrcp.pop %v1251
  %v1526 = vmul.f32 %v1454, %v1525
  %v1527 = vrcp.pop %v1254
  %v1528 = vmul.f32 %v1457, %v1527
  %v1529 = vrcp.pop %v1257
  %v1530 = vmul.f32 %v1460, %v1529
  %v1531 = vrcp.pop %v1260
  %v1532 = vmul.f32 %v1463, %v1531
  %v1533 = vrcp.pop %v1263
  %v1534 = vmul.f32 %v1466, %v1533
  %v1535 = vrcp.pop %v1266
  %v1536 = vmul.f32 %v1469, %v1535
  %v1537 = vrcp.pop %v1269
  %v1538 = vmul.f32 %v1472, %v1537
  %v1539 = vrcp.pop %v1272
  %v1540 = vmul.f32 %v1475, %v1539
  %v1541 = vrcp.pop %v1275
  %v1542 = vmul.f32 %v1478, %v1541
  %v1543 = vrcp.pop %v1278
  %v1544 = vmul.f32 %v1481, %v1543
  %v1545 = vrcp.pop %v1281
  %v1546 = vmul.f32 %v1484, %v1545
  %v1547 = vrcp.pop %v1284
  %v1548 = vmul.f32 %v1487, %v1547
  %v1549 = vrcp.pop %v1287
  %v1550 = vmul.f32 %v1490, %v1549
  %v1551 = vrcp.pop %v1290
  %v1552 = vmul.f32 %v1493, %v1551
  %v1553 = vrcp.pop %v1293
  %v1554 = vmul.f32 %v1496, %v1553
  %v1555 = vrcp.pop %v1296
  %v1556 = vmul.f32 %v1499, %v1555
  %v1557 = vrcp.pop %v1299
  %v1558 = vmul.f32 %v1502, %v1557
  %v1559 = vrcp.pop %v1302
  %v1560 = vmul.f32 %v1505, %v1559
  %v1561 = vrcp.pop %v1305
  %v1562 = vmul.f32 %v1508, %v1561
  %v1563 = vrcp.pop %v1308
  %v1564 = vmul.f32 %v1511, %v1563
  %v1565 = vrcp.pop %v1311
  %v1566 = vmul.f32 %v1514, %v1565
  %v1567 = vrcp.pop %v1314
  %v1568 = vmul.f32 %v1517, %v1567
  %v1569 = vrcp.pop %v1317
  %v1570 = vmul.f32 %v1520, %v1569
  %vm1571 = vcmask 556440
  %v1572 = vsel %vm1571, %v8, -inf
  %1573 = vmax.xlane.f32.xlu0 %v1572
  %v1574 = vpop.xlane.xlu0 %1573
  %v1575 = vsel %vm1571, %v9, -inf
  %1576 = vmax.xlane.f32.xlu0 %v1575
  %v1577 = vpop.xlane.xlu0 %1576
  %v1578 = vsel %vm1571, %v10, -inf
  %1579 = vmax.xlane.f32.xlu0 %v1578
  %v1580 = vpop.xlane.xlu0 %1579
  %v1581 = vsel %vm1571, %v11, -inf
  %1582 = vmax.xlane.f32.xlu0 %v1581
  %v1583 = vpop.xlane.xlu0 %1582
  %v1584 = vsel %vm1571, %v12, -inf
  %1585 = vmax.xlane.f32.xlu0 %v1584
  %v1586 = vpop.xlane.xlu0 %1585
  %v1587 = vsel %vm1571, %v13, -inf
  %1588 = vmax.xlane.f32.xlu0 %v1587
  %v1589 = vpop.xlane.xlu0 %1588
  %v1590 = vsel %vm1571, %v14, -inf
  %1591 = vmax.xlane.f32.xlu0 %v1590
  %v1592 = vpop.xlane.xlu0 %1591
  %v1593 = vsel %vm1571, %v15, -inf
  %1594 = vmax.xlane.f32.xlu0 %v1593
  %v1595 = vpop.xlane.xlu0 %1594
  %v1596 = vsel %vm1571, %v16, -inf
  %1597 = vmax.xlane.f32.xlu0 %v1596
  %v1598 = vpop.xlane.xlu0 %1597
  %v1599 = vsel %vm1571, %v17, -inf
  %1600 = vmax.xlane.f32.xlu0 %v1599
  %v1601 = vpop.xlane.xlu0 %1600
  %v1602 = vsel %vm1571, %v18, -inf
  %1603 = vmax.xlane.f32.xlu0 %v1602
  %v1604 = vpop.xlane.xlu0 %1603
  %v1605 = vsel %vm1571, %v19, -inf
  %1606 = vmax.xlane.f32.xlu0 %v1605
  %v1607 = vpop.xlane.xlu0 %1606
  %v1608 = vsel %vm1571, %v20, -inf
  %1609 = vmax.xlane.f32.xlu0 %v1608
  %v1610 = vpop.xlane.xlu0 %1609
  %v1611 = vsel %vm1571, %v21, -inf
  %1612 = vmax.xlane.f32.xlu0 %v1611
  %v1613 = vpop.xlane.xlu0 %1612
  %v1614 = vsel %vm1571, %v22, -inf
  %1615 = vmax.xlane.f32.xlu0 %v1614
  %v1616 = vpop.xlane.xlu0 %1615
  %v1617 = vsel %vm1571, %v23, -inf
  %1618 = vmax.xlane.f32.xlu0 %v1617
  %v1619 = vpop.xlane.xlu0 %1618
  %v1620 = vsel %vm1571, %v24, -inf
  %1621 = vmax.xlane.f32.xlu0 %v1620
  %v1622 = vpop.xlane.xlu0 %1621
  %v1623 = vsel %vm1571, %v25, -inf
  %1624 = vmax.xlane.f32.xlu0 %v1623
  %v1625 = vpop.xlane.xlu0 %1624
  %v1626 = vsel %vm1571, %v26, -inf
  %1627 = vmax.xlane.f32.xlu0 %v1626
  %v1628 = vpop.xlane.xlu0 %1627
  %v1629 = vsel %vm1571, %v27, -inf
  %1630 = vmax.xlane.f32.xlu0 %v1629
  %v1631 = vpop.xlane.xlu0 %1630
  %v1632 = vsel %vm1571, %v28, -inf
  %1633 = vmax.xlane.f32.xlu0 %v1632
  %v1634 = vpop.xlane.xlu0 %1633
  %v1635 = vsel %vm1571, %v29, -inf
  %1636 = vmax.xlane.f32.xlu0 %v1635
  %v1637 = vpop.xlane.xlu0 %1636
  %v1638 = vsel %vm1571, %v30, -inf
  %1639 = vmax.xlane.f32.xlu0 %v1638
  %v1640 = vpop.xlane.xlu0 %1639
  %v1641 = vsel %vm1571, %v31, -inf
  %1642 = vmax.xlane.f32.xlu0 %v1641
  %v1643 = vpop.xlane.xlu0 %1642
  %v1644 = vsel %vm1571, %v32, -inf
  %1645 = vmax.xlane.f32.xlu0 %v1644
  %v1646 = vpop.xlane.xlu0 %1645
  %v1647 = vsub.f32 %v8, %v1574
  %v1648 = vsub.f32 %v9, %v1577
  %v1649 = vsub.f32 %v10, %v1580
  %v1650 = vsub.f32 %v11, %v1583
  %v1651 = vsub.f32 %v12, %v1586
  %v1652 = vsub.f32 %v13, %v1589
  %v1653 = vsub.f32 %v14, %v1592
  %v1654 = vsub.f32 %v15, %v1595
  %v1655 = vsub.f32 %v16, %v1598
  %v1656 = vsub.f32 %v17, %v1601
  %v1657 = vsub.f32 %v18, %v1604
  %v1658 = vsub.f32 %v19, %v1607
  %v1659 = vsub.f32 %v20, %v1610
  %v1660 = vsub.f32 %v21, %v1613
  %v1661 = vsub.f32 %v22, %v1616
  %v1662 = vsub.f32 %v23, %v1619
  %v1663 = vsub.f32 %v24, %v1622
  %v1664 = vsub.f32 %v25, %v1625
  %v1665 = vsub.f32 %v26, %v1628
  %v1666 = vsub.f32 %v27, %v1631
  %v1667 = vsub.f32 %v28, %v1634
  %v1668 = vsub.f32 %v29, %v1637
  %v1669 = vsub.f32 %v30, %v1640
  %v1670 = vsub.f32 %v31, %v1643
  %v1671 = vsub.f32 %v32, %v1646
  %v1672 = vmul.f32 %v1647, 1.442695
  %v1673 = vpow.pop %v1672
  %v1674 = vmul.f32 %v1648, 1.442695
  %v1675 = vpow.pop %v1674
  %v1676 = vmul.f32 %v1649, 1.442695
  %v1677 = vpow.pop %v1676
  %v1678 = vmul.f32 %v1650, 1.442695
  %v1679 = vpow.pop %v1678
  %v1680 = vmul.f32 %v1651, 1.442695
  %v1681 = vpow.pop %v1680
  %v1682 = vmul.f32 %v1652, 1.442695
  %v1683 = vpow.pop %v1682
  %v1684 = vmul.f32 %v1653, 1.442695
  %v1685 = vpow.pop %v1684
  %v1686 = vmul.f32 %v1654, 1.442695
  %v1687 = vpow.pop %v1686
  %v1688 = vmul.f32 %v1655, 1.442695
  %v1689 = vpow.pop %v1688
  %v1690 = vmul.f32 %v1656, 1.442695
  %v1691 = vpow.pop %v1690
  %v1692 = vmul.f32 %v1657, 1.442695
  %v1693 = vpow.pop %v1692
  %v1694 = vmul.f32 %v1658, 1.442695
  %v1695 = vpow.pop %v1694
  %v1696 = vmul.f32 %v1659, 1.442695
  %v1697 = vpow.pop %v1696
  %v1698 = vmul.f32 %v1660, 1.442695
  %v1699 = vpow.pop %v1698
  %v1700 = vmul.f32 %v1661, 1.442695
  %v1701 = vpow.pop %v1700
  %v1702 = vmul.f32 %v1662, 1.442695
  %v1703 = vpow.pop %v1702
  %v1704 = vmul.f32 %v1663, 1.442695
  %v1705 = vpow.pop %v1704
  %v1706 = vmul.f32 %v1664, 1.442695
  %v1707 = vpow.pop %v1706
  %v1708 = vmul.f32 %v1665, 1.442695
  %v1709 = vpow.pop %v1708
  %v1710 = vmul.f32 %v1666, 1.442695
  %v1711 = vpow.pop %v1710
  %v1712 = vmul.f32 %v1667, 1.442695
  %v1713 = vpow.pop %v1712
  %v1714 = vmul.f32 %v1668, 1.442695
  %v1715 = vpow.pop %v1714
  %v1716 = vmul.f32 %v1669, 1.442695
  %v1717 = vpow.pop %v1716
  %v1718 = vmul.f32 %v1670, 1.442695
  %v1719 = vpow.pop %v1718
  %v1720 = vmul.f32 %v1671, 1.442695
  %v1721 = vpow.pop %v1720
  %1747 = vrot.lane.b32.xlu0 %v1673, 77
  %v1748 = vpop.permute.xlu0 %1747
  %1749 = vrot.lane.b32.xlu0 %v1675, 77
  %v1750 = vpop.permute.xlu0 %1749
  %1751 = vrot.lane.b32.xlu0 %v1677, 77
  %v1752 = vpop.permute.xlu0 %1751
  %1753 = vrot.lane.b32.xlu0 %v1679, 77
  %v1754 = vpop.permute.xlu0 %1753
  %1755 = vrot.lane.b32.xlu0 %v1681, 77
  %v1756 = vpop.permute.xlu0 %1755
  %1757 = vrot.lane.b32.xlu0 %v1683, 77
  %v1758 = vpop.permute.xlu0 %1757
  %1759 = vrot.lane.b32.xlu0 %v1685, 77
  %v1760 = vpop.permute.xlu0 %1759
  %1761 = vrot.lane.b32.xlu0 %v1687, 77
  %v1762 = vpop.permute.xlu0 %1761
  %1763 = vrot.lane.b32.xlu0 %v1689, 77
  %v1764 = vpop.permute.xlu0 %1763
  %1765 = vrot.lane.b32.xlu0 %v1691, 77
  %v1766 = vpop.permute.xlu0 %1765
  %1767 = vrot.lane.b32.xlu0 %v1693, 77
  %v1768 = vpop.permute.xlu0 %1767
  %1769 = vrot.lane.b32.xlu0 %v1695, 77
  %v1770 = vpop.permute.xlu0 %1769
  %1771 = vrot.lane.b32.xlu0 %v1697, 77
  %v1772 = vpop.permute.xlu0 %1771
  %1773 = vrot.lane.b32.xlu0 %v1699, 77
  %v1774 = vpop.permute.xlu0 %1773
  %1775 = vrot.lane.b32.xlu0 %v1701, 77
  %v1776 = vpop.permute.xlu0 %1775
  %1777 = vrot.lane.b32.xlu0 %v1703, 77
  %v1778 = vpop.permute.xlu0 %1777
  %1779 = vrot.lane.b32.xlu0 %v1705, 77
  %v1780 = vpop.permute.xlu0 %1779
  %1781 = vrot.lane.b32.xlu0 %v1707, 77
  %v1782 = vpop.permute.xlu0 %1781
  %1783 = vrot.lane.b32.xlu0 %v1709, 77
  %v1784 = vpop.permute.xlu0 %1783
  %1785 = vrot.lane.b32.xlu0 %v1711, 77
  %v1786 = vpop.permute.xlu0 %1785
  %1787 = vrot.lane.b32.xlu0 %v1713, 77
  %v1788 = vpop.permute.xlu0 %1787
  %1789 = vrot.lane.b32.xlu0 %v1715, 77
  %v1790 = vpop.permute.xlu0 %1789
  %1791 = vrot.lane.b32.xlu0 %v1717, 77
  %v1792 = vpop.permute.xlu0 %1791
  %1793 = vrot.lane.b32.xlu0 %v1719, 77
  %v1794 = vpop.permute.xlu0 %1793
  %1795 = vrot.lane.b32.xlu0 %v1721, 77
  %v1796 = vpop.permute.xlu0 %1795
  %v1822 = vsel %vm36, %v1748, 0.0
  %1823 = vadd.xlane.f32.xlu0 %v1822
  %v1824 = vpop.xlane.xlu0 %1823
  %v1825 = vsel %vm36, %v1750, 0.0
  %1826 = vadd.xlane.f32.xlu0 %v1825
  %v1827 = vpop.xlane.xlu0 %1826
  %v1828 = vsel %vm36, %v1752, 0.0
  %1829 = vadd.xlane.f32.xlu0 %v1828
  %v1830 = vpop.xlane.xlu0 %1829
  %v1831 = vsel %vm36, %v1754, 0.0
  %1832 = vadd.xlane.f32.xlu0 %v1831
  %v1833 = vpop.xlane.xlu0 %1832
  %v1834 = vsel %vm36, %v1756, 0.0
  %1835 = vadd.xlane.f32.xlu0 %v1834
  %v1836 = vpop.xlane.xlu0 %1835
  %v1837 = vsel %vm36, %v1758, 0.0
  %1838 = vadd.xlane.f32.xlu0 %v1837
  %v1839 = vpop.xlane.xlu0 %1838
  %v1840 = vsel %vm36, %v1760, 0.0
  %1841 = vadd.xlane.f32.xlu0 %v1840
  %v1842 = vpop.xlane.xlu0 %1841
  %v1843 = vsel %vm36, %v1762, 0.0
  %1844 = vadd.xlane.f32.xlu0 %v1843
  %v1845 = vpop.xlane.xlu0 %1844
  %v1846 = vsel %vm36, %v1764, 0.0
  %1847 = vadd.xlane.f32.xlu0 %v1846
  %v1848 = vpop.xlane.xlu0 %1847
  %v1849 = vsel %vm36, %v1766, 0.0
  %1850 = vadd.xlane.f32.xlu0 %v1849
  %v1851 = vpop.xlane.xlu0 %1850
  %v1852 = vsel %vm36, %v1768, 0.0
  %1853 = vadd.xlane.f32.xlu0 %v1852
  %v1854 = vpop.xlane.xlu0 %1853
  %v1855 = vsel %vm36, %v1770, 0.0
  %1856 = vadd.xlane.f32.xlu0 %v1855
  %v1857 = vpop.xlane.xlu0 %1856
  %v1858 = vsel %vm36, %v1772, 0.0
  %1859 = vadd.xlane.f32.xlu0 %v1858
  %v1860 = vpop.xlane.xlu0 %1859
  %v1861 = vsel %vm36, %v1774, 0.0
  %1862 = vadd.xlane.f32.xlu0 %v1861
  %v1863 = vpop.xlane.xlu0 %1862
  %v1864 = vsel %vm36, %v1776, 0.0
  %1865 = vadd.xlane.f32.xlu0 %v1864
  %v1866 = vpop.xlane.xlu0 %1865
  %v1867 = vsel %vm36, %v1778, 0.0
  %1868 = vadd.xlane.f32.xlu0 %v1867
  %v1869 = vpop.xlane.xlu0 %1868
  %v1870 = vsel %vm36, %v1780, 0.0
  %1871 = vadd.xlane.f32.xlu0 %v1870
  %v1872 = vpop.xlane.xlu0 %1871
  %v1873 = vsel %vm36, %v1782, 0.0
  %1874 = vadd.xlane.f32.xlu0 %v1873
  %v1875 = vpop.xlane.xlu0 %1874
  %v1876 = vsel %vm36, %v1784, 0.0
  %1877 = vadd.xlane.f32.xlu0 %v1876
  %v1878 = vpop.xlane.xlu0 %1877
  %v1879 = vsel %vm36, %v1786, 0.0
  %1880 = vadd.xlane.f32.xlu0 %v1879
  %v1881 = vpop.xlane.xlu0 %1880
  %v1882 = vsel %vm36, %v1788, 0.0
  %1883 = vadd.xlane.f32.xlu0 %v1882
  %v1884 = vpop.xlane.xlu0 %1883
  %v1885 = vsel %vm36, %v1790, 0.0
  %1886 = vadd.xlane.f32.xlu0 %v1885
  %v1887 = vpop.xlane.xlu0 %1886
  %v1888 = vsel %vm36, %v1792, 0.0
  %1889 = vadd.xlane.f32.xlu0 %v1888
  %v1890 = vpop.xlane.xlu0 %1889
  %v1891 = vsel %vm36, %v1794, 0.0
  %1892 = vadd.xlane.f32.xlu0 %v1891
  %v1893 = vpop.xlane.xlu0 %1892
  %v1894 = vsel %vm36, %v1796, 0.0
  %1895 = vadd.xlane.f32.xlu0 %v1894
  %v1896 = vpop.xlane.xlu0 %1895
  %1897 = vrot.lane.b32.xlu0 %v35, 51
  %v1898 = vpop.permute.xlu0 %1897
  %v1900 = vmul.f32 %v1673, %v1898
  %v1901 = vmul.f32 %v1675, %v1898
  %v1902 = vmul.f32 %v1677, %v1898
  %v1903 = vmul.f32 %v1679, %v1898
  %v1904 = vmul.f32 %v1681, %v1898
  %v1905 = vmul.f32 %v1683, %v1898
  %v1906 = vmul.f32 %v1685, %v1898
  %v1907 = vmul.f32 %v1687, %v1898
  %v1908 = vmul.f32 %v1689, %v1898
  %v1909 = vmul.f32 %v1691, %v1898
  %v1910 = vmul.f32 %v1693, %v1898
  %v1911 = vmul.f32 %v1695, %v1898
  %v1912 = vmul.f32 %v1697, %v1898
  %v1913 = vmul.f32 %v1699, %v1898
  %v1914 = vmul.f32 %v1701, %v1898
  %v1915 = vmul.f32 %v1703, %v1898
  %v1916 = vmul.f32 %v1705, %v1898
  %v1917 = vmul.f32 %v1707, %v1898
  %v1918 = vmul.f32 %v1709, %v1898
  %v1919 = vmul.f32 %v1711, %v1898
  %v1920 = vmul.f32 %v1713, %v1898
  %v1921 = vmul.f32 %v1715, %v1898
  %v1922 = vmul.f32 %v1717, %v1898
  %v1923 = vmul.f32 %v1719, %v1898
  %v1924 = vmul.f32 %v1721, %v1898
  %1950 = vrot.lane.b32.xlu0 %v1900, 77
  %v1951 = vpop.permute.xlu0 %1950
  %1952 = vrot.lane.b32.xlu0 %v1901, 77
  %v1953 = vpop.permute.xlu0 %1952
  %1954 = vrot.lane.b32.xlu0 %v1902, 77
  %v1955 = vpop.permute.xlu0 %1954
  %1956 = vrot.lane.b32.xlu0 %v1903, 77
  %v1957 = vpop.permute.xlu0 %1956
  %1958 = vrot.lane.b32.xlu0 %v1904, 77
  %v1959 = vpop.permute.xlu0 %1958
  %1960 = vrot.lane.b32.xlu0 %v1905, 77
  %v1961 = vpop.permute.xlu0 %1960
  %1962 = vrot.lane.b32.xlu0 %v1906, 77
  %v1963 = vpop.permute.xlu0 %1962
  %1964 = vrot.lane.b32.xlu0 %v1907, 77
  %v1965 = vpop.permute.xlu0 %1964
  %1966 = vrot.lane.b32.xlu0 %v1908, 77
  %v1967 = vpop.permute.xlu0 %1966
  %1968 = vrot.lane.b32.xlu0 %v1909, 77
  %v1969 = vpop.permute.xlu0 %1968
  %1970 = vrot.lane.b32.xlu0 %v1910, 77
  %v1971 = vpop.permute.xlu0 %1970
  %1972 = vrot.lane.b32.xlu0 %v1911, 77
  %v1973 = vpop.permute.xlu0 %1972
  %1974 = vrot.lane.b32.xlu0 %v1912, 77
  %v1975 = vpop.permute.xlu0 %1974
  %1976 = vrot.lane.b32.xlu0 %v1913, 77
  %v1977 = vpop.permute.xlu0 %1976
  %1978 = vrot.lane.b32.xlu0 %v1914, 77
  %v1979 = vpop.permute.xlu0 %1978
  %1980 = vrot.lane.b32.xlu0 %v1915, 77
  %v1981 = vpop.permute.xlu0 %1980
  %1982 = vrot.lane.b32.xlu0 %v1916, 77
  %v1983 = vpop.permute.xlu0 %1982
  %1984 = vrot.lane.b32.xlu0 %v1917, 77
  %v1985 = vpop.permute.xlu0 %1984
  %1986 = vrot.lane.b32.xlu0 %v1918, 77
  %v1987 = vpop.permute.xlu0 %1986
  %1988 = vrot.lane.b32.xlu0 %v1919, 77
  %v1989 = vpop.permute.xlu0 %1988
  %1990 = vrot.lane.b32.xlu0 %v1920, 77
  %v1991 = vpop.permute.xlu0 %1990
  %1992 = vrot.lane.b32.xlu0 %v1921, 77
  %v1993 = vpop.permute.xlu0 %1992
  %1994 = vrot.lane.b32.xlu0 %v1922, 77
  %v1995 = vpop.permute.xlu0 %1994
  %1996 = vrot.lane.b32.xlu0 %v1923, 77
  %v1997 = vpop.permute.xlu0 %1996
  %1998 = vrot.lane.b32.xlu0 %v1924, 77
  %v1999 = vpop.permute.xlu0 %1998
  %v2025 = vsel %vm36, %v1951, 0.0
  %2026 = vadd.xlane.f32.xlu0 %v2025
  %v2027 = vpop.xlane.xlu0 %2026
  %v2028 = vsel %vm36, %v1953, 0.0
  %2029 = vadd.xlane.f32.xlu0 %v2028
  %v2030 = vpop.xlane.xlu0 %2029
  %v2031 = vsel %vm36, %v1955, 0.0
  %2032 = vadd.xlane.f32.xlu0 %v2031
  %v2033 = vpop.xlane.xlu0 %2032
  %v2034 = vsel %vm36, %v1957, 0.0
  %2035 = vadd.xlane.f32.xlu0 %v2034
  %v2036 = vpop.xlane.xlu0 %2035
  %v2037 = vsel %vm36, %v1959, 0.0
  %2038 = vadd.xlane.f32.xlu0 %v2037
  %v2039 = vpop.xlane.xlu0 %2038
  %v2040 = vsel %vm36, %v1961, 0.0
  %2041 = vadd.xlane.f32.xlu0 %v2040
  %v2042 = vpop.xlane.xlu0 %2041
  %v2043 = vsel %vm36, %v1963, 0.0
  %2044 = vadd.xlane.f32.xlu0 %v2043
  %v2045 = vpop.xlane.xlu0 %2044
  %v2046 = vsel %vm36, %v1965, 0.0
  %2047 = vadd.xlane.f32.xlu0 %v2046
  %v2048 = vpop.xlane.xlu0 %2047
  %v2049 = vsel %vm36, %v1967, 0.0
  %2050 = vadd.xlane.f32.xlu0 %v2049
  %v2051 = vpop.xlane.xlu0 %2050
  %v2052 = vsel %vm36, %v1969, 0.0
  %2053 = vadd.xlane.f32.xlu0 %v2052
  %v2054 = vpop.xlane.xlu0 %2053
  %v2055 = vsel %vm36, %v1971, 0.0
  %2056 = vadd.xlane.f32.xlu0 %v2055
  %v2057 = vpop.xlane.xlu0 %2056
  %v2058 = vsel %vm36, %v1973, 0.0
  %2059 = vadd.xlane.f32.xlu0 %v2058
  %v2060 = vpop.xlane.xlu0 %2059
  %v2061 = vsel %vm36, %v1975, 0.0
  %2062 = vadd.xlane.f32.xlu0 %v2061
  %v2063 = vpop.xlane.xlu0 %2062
  %v2064 = vsel %vm36, %v1977, 0.0
  %2065 = vadd.xlane.f32.xlu0 %v2064
  %v2066 = vpop.xlane.xlu0 %2065
  %v2067 = vsel %vm36, %v1979, 0.0
  %2068 = vadd.xlane.f32.xlu0 %v2067
  %v2069 = vpop.xlane.xlu0 %2068
  %v2070 = vsel %vm36, %v1981, 0.0
  %2071 = vadd.xlane.f32.xlu0 %v2070
  %v2072 = vpop.xlane.xlu0 %2071
  %v2073 = vsel %vm36, %v1983, 0.0
  %2074 = vadd.xlane.f32.xlu0 %v2073
  %v2075 = vpop.xlane.xlu0 %2074
  %v2076 = vsel %vm36, %v1985, 0.0
  %2077 = vadd.xlane.f32.xlu0 %v2076
  %v2078 = vpop.xlane.xlu0 %2077
  %v2079 = vsel %vm36, %v1987, 0.0
  %2080 = vadd.xlane.f32.xlu0 %v2079
  %v2081 = vpop.xlane.xlu0 %2080
  %v2082 = vsel %vm36, %v1989, 0.0
  %2083 = vadd.xlane.f32.xlu0 %v2082
  %v2084 = vpop.xlane.xlu0 %2083
  %v2085 = vsel %vm36, %v1991, 0.0
  %2086 = vadd.xlane.f32.xlu0 %v2085
  %v2087 = vpop.xlane.xlu0 %2086
  %v2088 = vsel %vm36, %v1993, 0.0
  %2089 = vadd.xlane.f32.xlu0 %v2088
  %v2090 = vpop.xlane.xlu0 %2089
  %v2091 = vsel %vm36, %v1995, 0.0
  %2092 = vadd.xlane.f32.xlu0 %v2091
  %v2093 = vpop.xlane.xlu0 %2092
  %v2094 = vsel %vm36, %v1997, 0.0
  %2095 = vadd.xlane.f32.xlu0 %v2094
  %v2096 = vpop.xlane.xlu0 %2095
  %v2097 = vsel %vm36, %v1999, 0.0
  %2098 = vadd.xlane.f32.xlu0 %v2097
  %v2099 = vpop.xlane.xlu0 %2098
  %v2100 = vrcp.pop %v1824
  %v2101 = vmul.f32 %v2027, %v2100
  %v2102 = vrcp.pop %v1827
  %v2103 = vmul.f32 %v2030, %v2102
  %v2104 = vrcp.pop %v1830
  %v2105 = vmul.f32 %v2033, %v2104
  %v2106 = vrcp.pop %v1833
  %v2107 = vmul.f32 %v2036, %v2106
  %v2108 = vrcp.pop %v1836
  %v2109 = vmul.f32 %v2039, %v2108
  %v2110 = vrcp.pop %v1839
  %v2111 = vmul.f32 %v2042, %v2110
  %v2112 = vrcp.pop %v1842
  %v2113 = vmul.f32 %v2045, %v2112
  %v2114 = vrcp.pop %v1845
  %v2115 = vmul.f32 %v2048, %v2114
  %v2116 = vrcp.pop %v1848
  %v2117 = vmul.f32 %v2051, %v2116
  %v2118 = vrcp.pop %v1851
  %v2119 = vmul.f32 %v2054, %v2118
  %v2120 = vrcp.pop %v1854
  %v2121 = vmul.f32 %v2057, %v2120
  %v2122 = vrcp.pop %v1857
  %v2123 = vmul.f32 %v2060, %v2122
  %v2124 = vrcp.pop %v1860
  %v2125 = vmul.f32 %v2063, %v2124
  %v2126 = vrcp.pop %v1863
  %v2127 = vmul.f32 %v2066, %v2126
  %v2128 = vrcp.pop %v1866
  %v2129 = vmul.f32 %v2069, %v2128
  %v2130 = vrcp.pop %v1869
  %v2131 = vmul.f32 %v2072, %v2130
  %v2132 = vrcp.pop %v1872
  %v2133 = vmul.f32 %v2075, %v2132
  %v2134 = vrcp.pop %v1875
  %v2135 = vmul.f32 %v2078, %v2134
  %v2136 = vrcp.pop %v1878
  %v2137 = vmul.f32 %v2081, %v2136
  %v2138 = vrcp.pop %v1881
  %v2139 = vmul.f32 %v2084, %v2138
  %v2140 = vrcp.pop %v1884
  %v2141 = vmul.f32 %v2087, %v2140
  %v2142 = vrcp.pop %v1887
  %v2143 = vmul.f32 %v2090, %v2142
  %v2144 = vrcp.pop %v1890
  %v2145 = vmul.f32 %v2093, %v2144
  %v2146 = vrcp.pop %v1893
  %v2147 = vmul.f32 %v2096, %v2146
  %v2148 = vrcp.pop %v1896
  %v2149 = vmul.f32 %v2099, %v2148
  %vm2150 = vcmask 7168
  %v2151 = vsel %vm2150, %v363, %v943
  %v2152 = vsel %vm2150, %v365, %v945
  %v2153 = vsel %vm2150, %v367, %v947
  %v2154 = vsel %vm2150, %v369, %v949
  %v2155 = vsel %vm2150, %v371, %v951
  %v2156 = vsel %vm2150, %v373, %v953
  %v2157 = vsel %vm2150, %v375, %v955
  %v2158 = vsel %vm2150, %v377, %v957
  %v2159 = vsel %vm2150, %v379, %v959
  %v2160 = vsel %vm2150, %v381, %v961
  %v2161 = vsel %vm2150, %v383, %v963
  %v2162 = vsel %vm2150, %v385, %v965
  %v2163 = vsel %vm2150, %v387, %v967
  %v2164 = vsel %vm2150, %v389, %v969
  %v2165 = vsel %vm2150, %v391, %v971
  %v2166 = vsel %vm2150, %v393, %v973
  %v2167 = vsel %vm2150, %v395, %v975
  %v2168 = vsel %vm2150, %v397, %v977
  %v2169 = vsel %vm2150, %v399, %v979
  %v2170 = vsel %vm2150, %v401, %v981
  %v2171 = vsel %vm2150, %v403, %v983
  %v2172 = vsel %vm2150, %v405, %v985
  %v2173 = vsel %vm2150, %v407, %v987
  %v2174 = vsel %vm2150, %v409, %v989
  %v2175 = vsel %vm2150, %v411, %v991
  %vm2176 = vcmask 15360
  %v2177 = vsel %vm2176, %v2151, %v1522
  %v2178 = vsel %vm2176, %v2152, %v1524
  %v2179 = vsel %vm2176, %v2153, %v1526
  %v2180 = vsel %vm2176, %v2154, %v1528
  %v2181 = vsel %vm2176, %v2155, %v1530
  %v2182 = vsel %vm2176, %v2156, %v1532
  %v2183 = vsel %vm2176, %v2157, %v1534
  %v2184 = vsel %vm2176, %v2158, %v1536
  %v2185 = vsel %vm2176, %v2159, %v1538
  %v2186 = vsel %vm2176, %v2160, %v1540
  %v2187 = vsel %vm2176, %v2161, %v1542
  %v2188 = vsel %vm2176, %v2162, %v1544
  %v2189 = vsel %vm2176, %v2163, %v1546
  %v2190 = vsel %vm2176, %v2164, %v1548
  %v2191 = vsel %vm2176, %v2165, %v1550
  %v2192 = vsel %vm2176, %v2166, %v1552
  %v2193 = vsel %vm2176, %v2167, %v1554
  %v2194 = vsel %vm2176, %v2168, %v1556
  %v2195 = vsel %vm2176, %v2169, %v1558
  %v2196 = vsel %vm2176, %v2170, %v1560
  %v2197 = vsel %vm2176, %v2171, %v1562
  %v2198 = vsel %vm2176, %v2172, %v1564
  %v2199 = vsel %vm2176, %v2173, %v1566
  %v2200 = vsel %vm2176, %v2174, %v1568
  %v2201 = vsel %vm2176, %v2175, %v1570
  %vm2202 = vcmask 23552
  %v2203 = vsel %vm2202, %v2177, %v2101
  %v2204 = vsel %vm2202, %v2178, %v2103
  %v2205 = vsel %vm2202, %v2179, %v2105
  %v2206 = vsel %vm2202, %v2180, %v2107
  %v2207 = vsel %vm2202, %v2181, %v2109
  %v2208 = vsel %vm2202, %v2182, %v2111
  %v2209 = vsel %vm2202, %v2183, %v2113
  %v2210 = vsel %vm2202, %v2184, %v2115
  %v2211 = vsel %vm2202, %v2185, %v2117
  %v2212 = vsel %vm2202, %v2186, %v2119
  %v2213 = vsel %vm2202, %v2187, %v2121
  %v2214 = vsel %vm2202, %v2188, %v2123
  %v2215 = vsel %vm2202, %v2189, %v2125
  %v2216 = vsel %vm2202, %v2190, %v2127
  %v2217 = vsel %vm2202, %v2191, %v2129
  %v2218 = vsel %vm2202, %v2192, %v2131
  %v2219 = vsel %vm2202, %v2193, %v2133
  %v2220 = vsel %vm2202, %v2194, %v2135
  %v2221 = vsel %vm2202, %v2195, %v2137
  %v2222 = vsel %vm2202, %v2196, %v2139
  %v2223 = vsel %vm2202, %v2197, %v2141
  %v2224 = vsel %vm2202, %v2198, %v2143
  %v2225 = vsel %vm2202, %v2199, %v2145
  %v2226 = vsel %vm2202, %v2200, %v2147
  %v2227 = vsel %vm2202, %v2201, %v2149
  %vm2228 = vcmask 31744
  %2229 = vst.msk [vmem:[%s1] sm:$0xff] %vm2228, %v2203
  %2230 = vst.msk [vmem:[%s1 + $0x8] sm:$0xff] %vm2228, %v2204
  %2231 = vst.msk [vmem:[%s1 + $0x10] sm:$0xff] %vm2228, %v2205
  %2232 = vst.msk [vmem:[%s1 + $0x18] sm:$0xff] %vm2228, %v2206
  %2233 = vst.msk [vmem:[%s1 + $0x20] sm:$0xff] %vm2228, %v2207
  %2234 = vst.msk [vmem:[%s1 + $0x28] sm:$0xff] %vm2228, %v2208
  %2235 = vst.msk [vmem:[%s1 + $0x30] sm:$0xff] %vm2228, %v2209
  %2236 = vst.msk [vmem:[%s1 + $0x38] sm:$0xff] %vm2228, %v2210
  %2237 = vst.msk [vmem:[%s1 + $0x40] sm:$0xff] %vm2228, %v2211
  %2238 = vst.msk [vmem:[%s1 + $0x48] sm:$0xff] %vm2228, %v2212
  %2239 = vst.msk [vmem:[%s1 + $0x50] sm:$0xff] %vm2228, %v2213
  %2240 = vst.msk [vmem:[%s1 + $0x58] sm:$0xff] %vm2228, %v2214
  %2241 = vst.msk [vmem:[%s1 + $0x60] sm:$0xff] %vm2228, %v2215
  %2242 = vst.msk [vmem:[%s1 + $0x68] sm:$0xff] %vm2228, %v2216
  %2243 = vst.msk [vmem:[%s1 + $0x70] sm:$0xff] %vm2228, %v2217
  %2244 = vst.msk [vmem:[%s1 + $0x78] sm:$0xff] %vm2228, %v2218
  %2245 = vst.msk [vmem:[%s1 + $0x80] sm:$0xff] %vm2228, %v2219
  %2246 = vst.msk [vmem:[%s1 + $0x88] sm:$0xff] %vm2228, %v2220
  %2247 = vst.msk [vmem:[%s1 + $0x90] sm:$0xff] %vm2228, %v2221
  %2248 = vst.msk [vmem:[%s1 + $0x98] sm:$0xff] %vm2228, %v2222
  %2249 = vst.msk [vmem:[%s1 + $0xa0] sm:$0xff] %vm2228, %v2223
  %2250 = vst.msk [vmem:[%s1 + $0xa8] sm:$0xff] %vm2228, %v2224
  %2251 = vst.msk [vmem:[%s1 + $0xb0] sm:$0xff] %vm2228, %v2225
  %2252 = vst.msk [vmem:[%s1 + $0xb8] sm:$0xff] %vm2228, %v2226
  %2253 = vst.msk [vmem:[%s1 + $0xc0] sm:$0xff] %vm2228, %v2227
  // Predicated region
  $region6: #{tpu_custom_call.1} parent=0 // pred_check
    _
  $region7: #{tpu_custom_call.1} parent=0 // pred_check_branch
    %2255 = sbr.rel (0) target = $region9
  $region8: #{tpu_custom_call.1} parent=0 // pred_region
    _
  $region9: #{tpu_custom_call.1} parent=0 // pred_fallthru
    _
  // Predicated region
  $region10: #{tpu_custom_call.1} parent=0 // pred_check
    _
  $region11: #{tpu_custom_call.1} parent=0 // pred_check_branch
    %2257 = sbr.rel (0) target = $region13
  $region12: #{tpu_custom_call.1} parent=0 // pred_region
    _
  $region13: #{tpu_custom_call.1} parent=0 // pred_fallthru
    _

</llo_original>
